<compile_context>
chip_gen: v7x
topology: tpu7x:2x2x1
jax: 0.10.0
libtpu: 0.0.40
codegen_flags: <defaults>
</compile_context>

<pallas_src>
import jax
import jax.numpy as jnp
from jax.experimental import pallas as pl
from jax.experimental.pallas import tpu as pltpu

MEM_DIM = 1050          # hardcoded in the PyTorch module (nn.Linear(2*1050, hidden))
HIDDEN_DIM = 32
NUM_CLASSES = 5
BATCH = 8               # small demo batch (gridless path)
BIG_BATCH = 1024        # larger batch exercising the tiled / weights-resident path


# ---------------------------------------------------------------------------
# Generation detection / tiling policy
# ---------------------------------------------------------------------------

def _device_kind():
    try:
        return jax.devices()[0].device_kind.lower()
    except Exception:  # pragma: no cover - defensive
        return ""


def _is_pre_v6(kind):
    # v2-v5 have no bf16 VPU path: keep elementwise feature math in f32 there.
    return any(tag in kind for tag in ("v2", "v3", "v4", "v5"))


def _is_v7(kind):
    return "v7" in kind


def _round_up(x, m):
    return ((x + m - 1) // m) * m


def _select_tiling(batch, kind):
    """Returns (use_grid, block_b) for a given batch size and TPU generation."""
    # Gridless single-block path: skips pipeline machinery entirely.
    # On v7x switch to the grid earlier so both TensorCores get used.
    gridless_threshold = 256 if _is_v7(kind) else 512
    if batch <= gridless_threshold:
        return False, batch
    # Grid path: biggest tile that stays inside the default scoped VMEM,
    # while guaranteeing at least 2 balanced tiles (v7x: one per TensorCore).
    cap = 512 if _is_pre_v6(kind) else 1024
    block_b = min(cap, _round_up(pl.cdiv(batch, 2), 8))
    return True, block_b


# ---------------------------------------------------------------------------
# Kernel
# ---------------------------------------------------------------------------

def make_similarity_kernel(feature_dtype):
    """feature_dtype: dtype for the elementwise mult/abs math.
    bf16 on v6e/v7x (native bf16 VPU), f32 on v5e and older."""

    def kernel(lvec_ref, rvec_ref, wh_mul_ref, wh_abs_ref, bh_ref,
               wp_ref, bp_ref, out_ref):
        l = lvec_ref[...].astype(feature_dtype)     # (tB, D)
        r = rvec_ref[...].astype(feature_dtype)     # (tB, D)

        mult_dist = l * r                           # (tB, D)
        abs_dist = jnp.abs(l - r)                   # (tB, D)

        # Hidden layer: two bf16 MXU dots with f32 accumulation + bias.
        h = (jnp.dot(mult_dist.astype(jnp.bfloat16), wh_mul_ref[...],
                     preferred_element_type=jnp.float32)
             + jnp.dot(abs_dist.astype(jnp.bfloat16), wh_abs_ref[...],
                       preferred_element_type=jnp.float32)
             + bh_ref[...])                         # (tB, H) f32

        # sigmoid: reciprocal on the EUP slot (approx vrcp), exp on EUP too.
        h = pl.reciprocal(1.0 + jnp.exp(-h), approx=True)

        # Output layer: (tB, H) @ (H, C) + (1, C), f32.
        logits = (jnp.dot(h, wp_ref[...], preferred_element_type=jnp.float32)
                  + bp_ref[...])

        # log_softmax over dim=1 (max-shifted, numerically stable).
        m = jnp.max(logits, axis=1, keepdims=True)
        shifted = logits - m
        lse = jnp.log(jnp.sum(jnp.exp(shifted), axis=1, keepdims=True))
        out_ref[...] = shifted - lse                # (tB, C) f32

    return kernel


# ---------------------------------------------------------------------------
# Parameter prep (one-time, hoisted out of the hot path)
# ---------------------------------------------------------------------------

def prepare_params(wh_w, wh_b, wp_w, wp_b):
    """wh_w: (H, 2D) PyTorch layout, wh_b: (H,), wp_w: (C, H), wp_b: (C,).
    Returns kernel-layout params: (wh_mul (D,H) bf16, wh_abs (D,H) bf16,
    bh (1,H) f32, wp_t (H,C) f32, bp (1,C) f32)."""
    H, two_d = wh_w.shape
    D = two_d // 2
    C = wp_w.shape[0]
    wh_t = wh_w.T.astype(jnp.bfloat16)     # (2D, H) bf16
    wh_mul = wh_t[:D, :]                   # (D, H)  acts on mult_dist
    wh_abs = wh_t[D:, :]                   # (D, H)  acts on abs_dist
    wp_t = wp_w.T.astype(jnp.float32)      # (H, C)  tiny -> keep f32
    bh = wh_b.reshape(1, H).astype(jnp.float32)
    bp = wp_b.reshape(1, C).astype(jnp.float32)
    return wh_mul, wh_abs, bh, wp_t, bp


# ---------------------------------------------------------------------------
# Forward wrapper
# ---------------------------------------------------------------------------

def similarity_forward(lvec, rvec, params, block_b=None):
    """lvec, rvec: (B, D) bf16 (preferred) or f32. params: prepare_params(...)."""
    wh_mul, wh_abs, bh, wp_t, bp = params
    B, D = lvec.shape
    H = wh_mul.shape[1]
    C = wp_t.shape[1]

    kind = _device_kind()
    feature_dtype = jnp.float32 if _is_pre_v6(kind) else jnp.bfloat16
    kernel = make_similarity_kernel(feature_dtype)

    out_shape = jax.ShapeDtypeStruct((B, C), jnp.float32)
    args = (lvec, rvec, wh_mul, wh_abs, bh, wp_t, bp)

    if block_b is None:
        use_grid, block_b = _select_tiling(B, kind)
    else:
        use_grid = B > block_b

    if not use_grid:
        # Single-block case: no grid, no pipelining machinery; everything
        # placed directly in VMEM (footprint << VMEM on all generations).
        vmem = pl.BlockSpec(memory_space=pltpu.MemorySpace.VMEM)
        return pl.pallas_call(
            kernel,
            out_shape=out_shape,
            in_specs=[vmem] * len(args),
            out_specs=vmem,
        )(*args)

    # Batched path: tile over rows; weights/biases stay resident in VMEM
    # across grid steps (index_map always returns block (0, 0)).
    num_tiles = pl.cdiv(B, block_b)
    row_spec = lambda width: pl.BlockSpec((block_b, width), lambda i: (i, 0))
    resident = lambda shape: pl.BlockSpec(shape, lambda i: (0, 0))
    return pl.pallas_call(
        kernel,
        out_shape=out_shape,
        grid=(num_tiles,),
        in_specs=[
            row_spec(D),          # lvec   (streamed, bf16)
            row_spec(D),          # rvec   (streamed, bf16)
            resident((D, H)),     # wh_mul (resident, bf16)
            resident((D, H)),     # wh_abs (resident, bf16)
            resident((1, H)),     # bh     (resident)
            resident((H, C)),     # wp     (resident)
            resident((1, C)),     # bp     (resident)
        ],
        out_specs=row_spec(C),
        compiler_params=pltpu.CompilerParams(
            dimension_semantics=("parallel",)),   # both TCs on v7x
    )(*args)


# ---------------------------------------------------------------------------
# Pure-JAX reference
# ---------------------------------------------------------------------------

def reference_forward(lvec, rvec, wh_w, wh_b, wp_w, wp_b):
    mult_dist = lvec * rvec
    abs_dist = jnp.abs(lvec - rvec)
    vec_dist = jnp.concatenate([mult_dist, abs_dist], axis=1)
    out = jax.nn.sigmoid(vec_dist @ wh_w.T + wh_b)
    out = jax.nn.log_softmax(out @ wp_w.T + wp_b, axis=1)
    return out


if __name__ == "__main__":
    key = jax.random.PRNGKey(0)
    keys = jax.random.split(key, 8)
    D, H, C = MEM_DIM, HIDDEN_DIM, NUM_CLASSES

    # Deterministic parameter init (PyTorch nn.Linear shapes / scales).
    in1 = 2 * D
    b1 = 1.0 / jnp.sqrt(in1)
    wh_w = jax.random.uniform(keys[0], (H, in1), jnp.float32, -b1, b1)
    wh_b = jax.random.uniform(keys[1], (H,), jnp.float32, -b1, b1)
    b2 = 1.0 / jnp.sqrt(H)
    wp_w = jax.random.uniform(keys[2], (C, H), jnp.float32, -b2, b2)
    wp_b = jax.random.uniform(keys[3], (C,), jnp.float32, -b2, b2)

    # One-time weight prep (hoisted out of the repeated-call path).
    params = jax.tree_util.tree_map(jax.block_until_ready,
                                    prepare_params(wh_w, wh_b, wp_w, wp_b))

    # Inputs stored upstream in bf16: halves the dominant HBM stream.
    # The reference consumes the same bf16 values (upcast), so the comparison
    # measures only kernel-internal error (bf16 weights/dots, f32 accumulate).
    TOL = 2.5e-2

    # --- Small batch: gridless, full-VMEM path ---
    lvec = jax.random.normal(keys[4], (BATCH, D), jnp.float32).astype(jnp.bfloat16)
    rvec = jax.random.normal(keys[5], (BATCH, D), jnp.float32).astype(jnp.bfloat16)
    out = jax.block_until_ready(similarity_forward(lvec, rvec, params))
    ref = reference_forward(lvec.astype(jnp.float32), rvec.astype(jnp.float32),
                            wh_w, wh_b, wp_w, wp_b)
    assert out.shape == (BATCH, C)
    assert jnp.allclose(out, ref, atol=TOL, rtol=TOL), "small-batch mismatch"

    # --- Large batch: tiled grid, weights resident, >=2 tiles (both TCs on v7x) ---
    lvec2 = jax.random.normal(keys[6], (BIG_BATCH, D), jnp.float32).astype(jnp.bfloat16)
    rvec2 = jax.random.normal(keys[7], (BIG_BATCH, D), jnp.float32).astype(jnp.bfloat16)
    out2 = jax.block_until_ready(similarity_forward(lvec2, rvec2, params))
    ref2 = reference_forward(lvec2.astype(jnp.float32), rvec2.astype(jnp.float32),
                             wh_w, wh_b, wp_w, wp_b)
    assert out2.shape == (BIG_BATCH, C)
    assert jnp.allclose(out2, ref2, atol=TOL, rtol=TOL), "big-batch mismatch"

    print("KERNEL_OK")
</pallas_src>

<mosaic_0001>
module attributes {stable_mosaic.version = 11 : i64} {
  func.func @kernel(%arg0: memref<8x1050xbf16, #tpu.memory_space<vmem>>, %arg1: memref<8x1050xbf16, #tpu.memory_space<vmem>>, %arg2: memref<1050x32xbf16, #tpu.memory_space<vmem>>, %arg3: memref<1050x32xbf16, #tpu.memory_space<vmem>>, %arg4: memref<1x32xf32, #tpu.memory_space<vmem>>, %arg5: memref<32x5xf32, #tpu.memory_space<vmem>>, %arg6: memref<1x5xf32, #tpu.memory_space<vmem>>, %arg7: memref<8x5xf32, #tpu.memory_space<vmem>>) attributes {dimension_semantics = [], scalar_prefetch = 0 : i64, scratch_operands = 0 : i64, tpu.core_type = #tpu.core_type<tc>} {
    %c0 = arith.constant 0 : index
    %c0_0 = arith.constant 0 : index
    %0 = vector.load %arg0[%c0, %c0_0] : memref<8x1050xbf16, #tpu.memory_space<vmem>>, vector<8x1050xbf16>
    %c0_1 = arith.constant 0 : index
    %c0_2 = arith.constant 0 : index
    %1 = vector.load %arg1[%c0_1, %c0_2] : memref<8x1050xbf16, #tpu.memory_space<vmem>>, vector<8x1050xbf16>
    %2 = arith.mulf %0, %1 : vector<8x1050xbf16>
    %3 = arith.subf %0, %1 : vector<8x1050xbf16>
    %4 = math.absf %3 : vector<8x1050xbf16>
    %c0_3 = arith.constant 0 : index
    %c0_4 = arith.constant 0 : index
    %5 = vector.load %arg2[%c0_3, %c0_4] : memref<1050x32xbf16, #tpu.memory_space<vmem>>, vector<1050x32xbf16>
    %cst = arith.constant dense<0.000000e+00> : vector<8x32xf32>
    %6 = tpu.matmul %2, %5, %cst {dimension_numbers = #tpu.dot_dimension_numbers<[1], [0], [0], [1], [0, 0, 1, 1], [], []>} : vector<8x1050xbf16>, vector<1050x32xbf16>, vector<8x32xf32> -> vector<8x32xf32>
    %c0_5 = arith.constant 0 : index
    %c0_6 = arith.constant 0 : index
    %7 = vector.load %arg3[%c0_5, %c0_6] : memref<1050x32xbf16, #tpu.memory_space<vmem>>, vector<1050x32xbf16>
    %cst_7 = arith.constant dense<0.000000e+00> : vector<8x32xf32>
    %8 = tpu.matmul %4, %7, %cst_7 {dimension_numbers = #tpu.dot_dimension_numbers<[1], [0], [0], [1], [0, 0, 1, 1], [], []>} : vector<8x1050xbf16>, vector<1050x32xbf16>, vector<8x32xf32> -> vector<8x32xf32>
    %9 = arith.addf %6, %8 : vector<8x32xf32>
    %c0_8 = arith.constant 0 : index
    %c0_9 = arith.constant 0 : index
    %10 = vector.load %arg4[%c0_8, %c0_9] : memref<1x32xf32, #tpu.memory_space<vmem>>, vector<1x32xf32>
    %11 = vector.broadcast %10 : vector<1x32xf32> to vector<8x32xf32>
    %12 = arith.addf %9, %11 : vector<8x32xf32>
    %cst_10 = arith.constant 0.000000e+00 : f32
    %13 = vector.broadcast %cst_10 : f32 to vector<8x32xf32>
    %14 = arith.subf %13, %12 : vector<8x32xf32>
    %15 = math.exp %14 : vector<8x32xf32>
    %cst_11 = arith.constant 1.000000e+00 : f32
    %16 = vector.broadcast %cst_11 : f32 to vector<8x32xf32>
    %17 = arith.addf %16, %15 : vector<8x32xf32>
    %18 = tpu.reciprocal %17 {approx = true} : vector<8x32xf32> -> vector<8x32xf32>
    %c0_12 = arith.constant 0 : index
    %c0_13 = arith.constant 0 : index
    %19 = vector.load %arg5[%c0_12, %c0_13] : memref<32x5xf32, #tpu.memory_space<vmem>>, vector<32x5xf32>
    %cst_14 = arith.constant dense<0.000000e+00> : vector<8x5xf32>
    %20 = tpu.matmul %18, %19, %cst_14 {dimension_numbers = #tpu.dot_dimension_numbers<[1], [0], [0], [1], [0, 0, 1, 1], [], []>} : vector<8x32xf32>, vector<32x5xf32>, vector<8x5xf32> -> vector<8x5xf32>
    %c0_15 = arith.constant 0 : index
    %c0_16 = arith.constant 0 : index
    %21 = vector.load %arg6[%c0_15, %c0_16] : memref<1x5xf32, #tpu.memory_space<vmem>>, vector<1x5xf32>
    %22 = vector.broadcast %21 : vector<1x5xf32> to vector<8x5xf32>
    %23 = arith.addf %20, %22 : vector<8x5xf32>
    %cst_17 = arith.constant dense<0xFF800000> : vector<8xf32>
    %24 = vector.multi_reduction <maximumf>, %23, %cst_17 [1] : vector<8x5xf32> to vector<8xf32>
    %25 = vector.shape_cast %24 : vector<8xf32> to vector<8x1xf32>
    %26 = vector.broadcast %25 : vector<8x1xf32> to vector<8x5xf32>
    %27 = arith.subf %23, %26 : vector<8x5xf32>
    %28 = math.exp %27 : vector<8x5xf32>
    %cst_18 = arith.constant dense<0.000000e+00> : vector<8xf32>
    %29 = vector.multi_reduction <add>, %28, %cst_18 [1] : vector<8x5xf32> to vector<8xf32>
    %30 = vector.shape_cast %29 : vector<8xf32> to vector<8x1xf32>
    %31 = math.log %30 : vector<8x1xf32>
    %32 = vector.broadcast %31 : vector<8x1xf32> to vector<8x5xf32>
    %33 = arith.subf %27, %32 : vector<8x5xf32>
    %c0_19 = arith.constant 0 : index
    %c0_20 = arith.constant 0 : index
    %34 = vector.load %arg7[%c0_19, %c0_20] : memref<8x5xf32, #tpu.memory_space<vmem>>, vector<8x5xf32>
    tpu.vector_store %arg7[%c0_19, %c0_20], %33 {strides = array<i32>} : memref<8x5xf32, #tpu.memory_space<vmem>>, vector<8x5xf32>,
    return
  }
}

</mosaic_0001>

<llo_original>
// kernel: tpu_custom_call.1
$region0: #{tpu_custom_call.1}
  #allocation0 [shape = 'u32[]', space=smem, size = 0x4, offset = 0x4, fixed_abs, tag = 'smem constant byte address 0x4 - core index']
  #allocation1 [shape = 'u32[144,128]{1,0:T(1,128)}', space=vmem, size = 0x12000, scoped, tag = 'internal scratch']
  %s0 = inlined_call_operand.vmem [shape: bf16[8,1050], index: 0, kind: input, shape index: {}]
  %s1 = inlined_call_operand.vmem [shape: bf16[8,1050], index: 1, kind: input, shape index: {}]
  %s2 = inlined_call_operand.vmem [shape: bf16[1050,32], index: 2, kind: input, shape index: {}]
  %s3 = inlined_call_operand.vmem [shape: bf16[1050,32], index: 3, kind: input, shape index: {}]
  %s4 = inlined_call_operand.vmem [shape: f32[1,32], index: 4, kind: input, shape index: {}]
  %s5 = inlined_call_operand.vmem [shape: f32[32,5], index: 5, kind: input, shape index: {}]
  %s6 = inlined_call_operand.vmem [shape: f32[1,5], index: 6, kind: input, shape index: {}]
  %s7 = inlined_call_operand.hbm [shape: f32[8,5], index: 7, kind: output, shape index: {}]
  %s8 = sld [smem:[#allocation0]]
  $region38: #{tpu_custom_call.1} parent=0
    _
  %s10 = ssub.s32 1, %s8
  %s11 = scalar_select 0, %s10, %s8
  $region1: #{tpu_custom_call.1} parent=0
    #allocation2 [shape = 'u8[4096]{0}', space=vmem, size = 0x1000, scoped, tag = 'output window, operand 0, single buffered']
    #allocation3 [shape = 's32[1]{0}', space=sflag, size = 0x4, scoped, tag = 'scoped memory for tpu_custom_call.1']
    %12 = vsyncpa [#allocation3], 0
    // Predicated region
    $region2: #{tpu_custom_call.1} parent=1 // pred_check
      _
    $region3: #{tpu_custom_call.1} parent=1 // pred_check_branch
      %14 = sbr.rel (0) target = $region5
    $region4: #{tpu_custom_call.1} parent=1 // pred_region
      _
    $region5: #{tpu_custom_call.1} parent=1 // pred_fallthru
      _
    // Predicated region
    $region6: #{tpu_custom_call.1} parent=1 // pred_check
      _
    $region7: #{tpu_custom_call.1} parent=1 // pred_check_branch
      %16 = sbr.rel (0) target = $region9
    $region8: #{tpu_custom_call.1} parent=1 // pred_region
      _
    $region9: #{tpu_custom_call.1} parent=1 // pred_fallthru
      _
    // Predicated region
    $region10: #{tpu_custom_call.1} parent=1 // pred_check
      _
    $region11: #{tpu_custom_call.1} parent=1 // pred_check_branch
      %18 = sbr.rel (0) target = $region13
    $region12: #{tpu_custom_call.1} parent=1 // pred_region
      _
    $region13: #{tpu_custom_call.1} parent=1 // pred_fallthru
      _
    // Predicated region
    $region14: #{tpu_custom_call.1} parent=1 // pred_check
      _
    $region15: #{tpu_custom_call.1} parent=1 // pred_check_branch
      %20 = sbr.rel (0) target = $region17
    $region16: #{tpu_custom_call.1} parent=1 // pred_region
      _
    $region17: #{tpu_custom_call.1} parent=1 // pred_fallthru
      _
    // Predicated region
    $region18: #{tpu_custom_call.1} parent=1 // pred_check
      _
    $region19: #{tpu_custom_call.1} parent=1 // pred_check_branch
      %22 = sbr.rel (0) target = $region21
    $region20: #{tpu_custom_call.1} parent=1 // pred_region
      _
    $region21: #{tpu_custom_call.1} parent=1 // pred_fallthru
      _
    // Predicated region
    $region22: #{tpu_custom_call.1} parent=1 // pred_check
      _
    $region23: #{tpu_custom_call.1} parent=1 // pred_check_branch
      %24 = sbr.rel (0) target = $region25
    $region24: #{tpu_custom_call.1} parent=1 // pred_region
      _
    $region25: #{tpu_custom_call.1} parent=1 // pred_fallthru
      _
    // Predicated region
    $region26: #{tpu_custom_call.1} parent=1 // pred_check
      _
    $region27: #{tpu_custom_call.1} parent=1 // pred_check_branch
      %26 = sbr.rel (0) target = $region29
    $region28: #{tpu_custom_call.1} parent=1 // pred_region
      _
    $region29: #{tpu_custom_call.1} parent=1 // pred_fallthru
      _
    %v28 = vld [vmem:[%s0] sm:$0xff]
    %v29 = vld [vmem:[%s0 + $0x8] sm:$0xff]
    %v30 = vld [vmem:[%s0 + $0x10] sm:$0xff]
    %v31 = vld [vmem:[%s0 + $0x18] sm:$0xff]
    %v32 = vld [vmem:[%s0 + $0x20] sm:$0xf]
    %v33 = vld [vmem:[%s1] sm:$0xff]
    %v34 = vld [vmem:[%s1 + $0x8] sm:$0xff]
    %v35 = vld [vmem:[%s1 + $0x10] sm:$0xff]
    %v36 = vld [vmem:[%s1 + $0x18] sm:$0xff]
    %v37 = vld [vmem:[%s1 + $0x20] sm:$0xf]
    %v38 = vmul.bf16 %v28, %v33
    %v39 = vmul.bf16 %v29, %v34
    %v40 = vmul.bf16 %v30, %v35
    %v41 = vmul.bf16 %v31, %v36
    %v42 = vmul.bf16 %v32, %v37
    %v43 = vsub.bf16 %v28, %v33
    %v44 = vsub.bf16 %v29, %v34
    %v45 = vsub.bf16 %v30, %v35
    %v46 = vsub.bf16 %v31, %v36
    %v47 = vsub.bf16 %v32, %v37
    %v48 = vand.u32 2147450879, %v43
    %v49 = vand.u32 2147450879, %v44
    %v50 = vand.u32 2147450879, %v45
    %v51 = vand.u32 2147450879, %v46
    %v52 = vand.u32 2147450879, %v47
    %v53 = vld [vmem:[%s2] sm:$0xf]
    %v54 = vld [vmem:[%s2 + $0x4] sm:$0xf]
    %v55 = vld [vmem:[%s2 + $0x8] sm:$0xf]
    %v56 = vld [vmem:[%s2 + $0xc] sm:$0xf]
    %v57 = vld [vmem:[%s2 + $0x10] sm:$0xf]
    %v58 = vld [vmem:[%s2 + $0x14] sm:$0xf]
    %v59 = vld [vmem:[%s2 + $0x18] sm:$0xf]
    %v60 = vld [vmem:[%s2 + $0x1c] sm:$0xf]
    %v61 = vld [vmem:[%s2 + $0x20] sm:$0xf]
    %v62 = vld [vmem:[%s2 + $0x24] sm:$0xf]
    %v63 = vld [vmem:[%s2 + $0x28] sm:$0xf]
    %v64 = vld [vmem:[%s2 + $0x2c] sm:$0xf]
    %v65 = vld [vmem:[%s2 + $0x30] sm:$0xf]
    %v66 = vld [vmem:[%s2 + $0x34] sm:$0xf]
    %v67 = vld [vmem:[%s2 + $0x38] sm:$0xf]
    %v68 = vld [vmem:[%s2 + $0x3c] sm:$0xf]
    %v69 = vld [vmem:[%s2 + $0x40] sm:$0xf]
    %v70 = vld [vmem:[%s2 + $0x44] sm:$0xf]
    %v71 = vld [vmem:[%s2 + $0x48] sm:$0xf]
    %v72 = vld [vmem:[%s2 + $0x4c] sm:$0xf]
    %v73 = vld [vmem:[%s2 + $0x50] sm:$0xf]
    %v74 = vld [vmem:[%s2 + $0x54] sm:$0xf]
    %v75 = vld [vmem:[%s2 + $0x58] sm:$0xf]
    %v76 = vld [vmem:[%s2 + $0x5c] sm:$0xf]
    %v77 = vld [vmem:[%s2 + $0x60] sm:$0xf]
    %v78 = vld [vmem:[%s2 + $0x64] sm:$0xf]
    %v79 = vld [vmem:[%s2 + $0x68] sm:$0xf]
    %v80 = vld [vmem:[%s2 + $0x6c] sm:$0xf]
    %v81 = vld [vmem:[%s2 + $0x70] sm:$0xf]
    %v82 = vld [vmem:[%s2 + $0x74] sm:$0xf]
    %v83 = vld [vmem:[%s2 + $0x78] sm:$0xf]
    %v84 = vld [vmem:[%s2 + $0x7c] sm:$0xf]
    %v85 = vld [vmem:[%s2 + $0x80] sm:$0xf]
    %v86 = vld [vmem:[%s2 + $0x84] sm:$0xf]
    %v87 = vld [vmem:[%s2 + $0x88] sm:$0xf]
    %v88 = vld [vmem:[%s2 + $0x8c] sm:$0xf]
    %v89 = vld [vmem:[%s2 + $0x90] sm:$0xf]
    %v90 = vld [vmem:[%s2 + $0x94] sm:$0xf]
    %v91 = vld [vmem:[%s2 + $0x98] sm:$0xf]
    %v92 = vld [vmem:[%s2 + $0x9c] sm:$0xf]
    %v93 = vld [vmem:[%s2 + $0xa0] sm:$0xf]
    %v94 = vld [vmem:[%s2 + $0xa4] sm:$0xf]
    %v95 = vld [vmem:[%s2 + $0xa8] sm:$0xf]
    %v96 = vld [vmem:[%s2 + $0xac] sm:$0xf]
    %v97 = vld [vmem:[%s2 + $0xb0] sm:$0xf]
    %v98 = vld [vmem:[%s2 + $0xb4] sm:$0xf]
    %v99 = vld [vmem:[%s2 + $0xb8] sm:$0xf]
    %v100 = vld [vmem:[%s2 + $0xbc] sm:$0xf]
    %v101 = vld [vmem:[%s2 + $0xc0] sm:$0xf]
    %v102 = vld [vmem:[%s2 + $0xc4] sm:$0xf]
    %v103 = vld [vmem:[%s2 + $0xc8] sm:$0xf]
    %v104 = vld [vmem:[%s2 + $0xcc] sm:$0xf]
    %v105 = vld [vmem:[%s2 + $0xd0] sm:$0xf]
    %v106 = vld [vmem:[%s2 + $0xd4] sm:$0xf]
    %v107 = vld [vmem:[%s2 + $0xd8] sm:$0xf]
    %v108 = vld [vmem:[%s2 + $0xdc] sm:$0xf]
    %v109 = vld [vmem:[%s2 + $0xe0] sm:$0xf]
    %v110 = vld [vmem:[%s2 + $0xe4] sm:$0xf]
    %v111 = vld [vmem:[%s2 + $0xe8] sm:$0xf]
    %v112 = vld [vmem:[%s2 + $0xec] sm:$0xf]
    %v113 = vld [vmem:[%s2 + $0xf0] sm:$0xf]
    %v114 = vld [vmem:[%s2 + $0xf4] sm:$0xf]
    %v115 = vld [vmem:[%s2 + $0xf8] sm:$0xf]
    %v116 = vld [vmem:[%s2 + $0xfc] sm:$0xf]
    %v117 = vld [vmem:[%s2 + $0x100] sm:$0xf]
    %v118 = vld [vmem:[%s2 + $0x104] sm:$0xf]
    %v119 = vld [vmem:[%s2 + $0x108] sm:$0xf]
    %v120 = vld [vmem:[%s2 + $0x10c] sm:$0xf]
    %v121 = vld [vmem:[%s2 + $0x110] sm:$0xf]
    %v122 = vld [vmem:[%s2 + $0x114] sm:$0xf]
    %v123 = vld [vmem:[%s2 + $0x118] sm:$0xf]
    %v124 = vld [vmem:[%s2 + $0x11c] sm:$0xf]
    %v125 = vld [vmem:[%s2 + $0x120] sm:$0xf]
    %v126 = vld [vmem:[%s2 + $0x124] sm:$0xf]
    %v127 = vld [vmem:[%s2 + $0x128] sm:$0xf]
    %v128 = vld [vmem:[%s2 + $0x12c] sm:$0xf]
    %v129 = vld [vmem:[%s2 + $0x130] sm:$0xf]
    %v130 = vld [vmem:[%s2 + $0x134] sm:$0xf]
    %v131 = vld [vmem:[%s2 + $0x138] sm:$0xf]
    %v132 = vld [vmem:[%s2 + $0x13c] sm:$0xf]
    %v133 = vld [vmem:[%s2 + $0x140] sm:$0xf]
    %v134 = vld [vmem:[%s2 + $0x144] sm:$0xf]
    %v135 = vld [vmem:[%s2 + $0x148] sm:$0xf]
    %v136 = vld [vmem:[%s2 + $0x14c] sm:$0xf]
    %v137 = vld [vmem:[%s2 + $0x150] sm:$0xf]
    %v138 = vld [vmem:[%s2 + $0x154] sm:$0xf]
    %v139 = vld [vmem:[%s2 + $0x158] sm:$0xf]
    %v140 = vld [vmem:[%s2 + $0x15c] sm:$0xf]
    %v141 = vld [vmem:[%s2 + $0x160] sm:$0xf]
    %v142 = vld [vmem:[%s2 + $0x164] sm:$0xf]
    %v143 = vld [vmem:[%s2 + $0x168] sm:$0xf]
    %v144 = vld [vmem:[%s2 + $0x16c] sm:$0xf]
    %v145 = vld [vmem:[%s2 + $0x170] sm:$0xf]
    %v146 = vld [vmem:[%s2 + $0x174] sm:$0xf]
    %v147 = vld [vmem:[%s2 + $0x178] sm:$0xf]
    %v148 = vld [vmem:[%s2 + $0x17c] sm:$0xf]
    %v149 = vld [vmem:[%s2 + $0x180] sm:$0xf]
    %v150 = vld [vmem:[%s2 + $0x184] sm:$0xf]
    %v151 = vld [vmem:[%s2 + $0x188] sm:$0xf]
    %v152 = vld [vmem:[%s2 + $0x18c] sm:$0xf]
    %v153 = vld [vmem:[%s2 + $0x190] sm:$0xf]
    %v154 = vld [vmem:[%s2 + $0x194] sm:$0xf]
    %v155 = vld [vmem:[%s2 + $0x198] sm:$0xf]
    %v156 = vld [vmem:[%s2 + $0x19c] sm:$0xf]
    %v157 = vld [vmem:[%s2 + $0x1a0] sm:$0xf]
    %v158 = vld [vmem:[%s2 + $0x1a4] sm:$0xf]
    %v159 = vld [vmem:[%s2 + $0x1a8] sm:$0xf]
    %v160 = vld [vmem:[%s2 + $0x1ac] sm:$0xf]
    %v161 = vld [vmem:[%s2 + $0x1b0] sm:$0xf]
    %v162 = vld [vmem:[%s2 + $0x1b4] sm:$0xf]
    %v163 = vld [vmem:[%s2 + $0x1b8] sm:$0xf]
    %v164 = vld [vmem:[%s2 + $0x1bc] sm:$0xf]
    %v165 = vld [vmem:[%s2 + $0x1c0] sm:$0xf]
    %v166 = vld [vmem:[%s2 + $0x1c4] sm:$0xf]
    %v167 = vld [vmem:[%s2 + $0x1c8] sm:$0xf]
    %v168 = vld [vmem:[%s2 + $0x1cc] sm:$0xf]
    %v169 = vld [vmem:[%s2 + $0x1d0] sm:$0xf]
    %v170 = vld [vmem:[%s2 + $0x1d4] sm:$0xf]
    %v171 = vld [vmem:[%s2 + $0x1d8] sm:$0xf]
    %v172 = vld [vmem:[%s2 + $0x1dc] sm:$0xf]
    %v173 = vld [vmem:[%s2 + $0x1e0] sm:$0xf]
    %v174 = vld [vmem:[%s2 + $0x1e4] sm:$0xf]
    %v175 = vld [vmem:[%s2 + $0x1e8] sm:$0xf]
    %v176 = vld [vmem:[%s2 + $0x1ec] sm:$0xf]
    %v177 = vld [vmem:[%s2 + $0x1f0] sm:$0xf]
    %v178 = vld [vmem:[%s2 + $0x1f4] sm:$0xf]
    %v179 = vld [vmem:[%s2 + $0x1f8] sm:$0xf]
    %v180 = vld [vmem:[%s2 + $0x1fc] sm:$0xf]
    %v181 = vld [vmem:[%s2 + $0x200] sm:$0xf]
    %v182 = vld [vmem:[%s2 + $0x204] sm:$0xf]
    %v183 = vld [vmem:[%s2 + $0x208] sm:$0xf]
    %v184 = vld [vmem:[%s2 + $0x20c] sm:$0x1]
    %v185 = vld [vmem:[%s3] sm:$0xf]
    %v186 = vld [vmem:[%s3 + $0x4] sm:$0xf]
    %v187 = vld [vmem:[%s3 + $0x8] sm:$0xf]
    %v188 = vld [vmem:[%s3 + $0xc] sm:$0xf]
    %v189 = vld [vmem:[%s3 + $0x10] sm:$0xf]
    %v190 = vld [vmem:[%s3 + $0x14] sm:$0xf]
    %v191 = vld [vmem:[%s3 + $0x18] sm:$0xf]
    %v192 = vld [vmem:[%s3 + $0x1c] sm:$0xf]
    %v193 = vld [vmem:[%s3 + $0x20] sm:$0xf]
    %v194 = vld [vmem:[%s3 + $0x24] sm:$0xf]
    %v195 = vld [vmem:[%s3 + $0x28] sm:$0xf]
    %v196 = vld [vmem:[%s3 + $0x2c] sm:$0xf]
    %v197 = vld [vmem:[%s3 + $0x30] sm:$0xf]
    %v198 = vld [vmem:[%s3 + $0x34] sm:$0xf]
    %v199 = vld [vmem:[%s3 + $0x38] sm:$0xf]
    %v200 = vld [vmem:[%s3 + $0x3c] sm:$0xf]
    %v201 = vld [vmem:[%s3 + $0x40] sm:$0xf]
    %v202 = vld [vmem:[%s3 + $0x44] sm:$0xf]
    %v203 = vld [vmem:[%s3 + $0x48] sm:$0xf]
    %v204 = vld [vmem:[%s3 + $0x4c] sm:$0xf]
    %v205 = vld [vmem:[%s3 + $0x50] sm:$0xf]
    %v206 = vld [vmem:[%s3 + $0x54] sm:$0xf]
    %v207 = vld [vmem:[%s3 + $0x58] sm:$0xf]
    %v208 = vld [vmem:[%s3 + $0x5c] sm:$0xf]
    %v209 = vld [vmem:[%s3 + $0x60] sm:$0xf]
    %v210 = vld [vmem:[%s3 + $0x64] sm:$0xf]
    %v211 = vld [vmem:[%s3 + $0x68] sm:$0xf]
    %v212 = vld [vmem:[%s3 + $0x6c] sm:$0xf]
    %v213 = vld [vmem:[%s3 + $0x70] sm:$0xf]
    %v214 = vld [vmem:[%s3 + $0x74] sm:$0xf]
    %v215 = vld [vmem:[%s3 + $0x78] sm:$0xf]
    %v216 = vld [vmem:[%s3 + $0x7c] sm:$0xf]
    %v217 = vld [vmem:[%s3 + $0x80] sm:$0xf]
    %v218 = vld [vmem:[%s3 + $0x84] sm:$0xf]
    %v219 = vld [vmem:[%s3 + $0x88] sm:$0xf]
    %v220 = vld [vmem:[%s3 + $0x8c] sm:$0xf]
    %v221 = vld [vmem:[%s3 + $0x90] sm:$0xf]
    %v222 = vld [vmem:[%s3 + $0x94] sm:$0xf]
    %v223 = vld [vmem:[%s3 + $0x98] sm:$0xf]
    %v224 = vld [vmem:[%s3 + $0x9c] sm:$0xf]
    %v225 = vld [vmem:[%s3 + $0xa0] sm:$0xf]
    %v226 = vld [vmem:[%s3 + $0xa4] sm:$0xf]
    %v227 = vld [vmem:[%s3 + $0xa8] sm:$0xf]
    %v228 = vld [vmem:[%s3 + $0xac] sm:$0xf]
    %v229 = vld [vmem:[%s3 + $0xb0] sm:$0xf]
    %v230 = vld [vmem:[%s3 + $0xb4] sm:$0xf]
    %v231 = vld [vmem:[%s3 + $0xb8] sm:$0xf]
    %v232 = vld [vmem:[%s3 + $0xbc] sm:$0xf]
    %v233 = vld [vmem:[%s3 + $0xc0] sm:$0xf]
    %v234 = vld [vmem:[%s3 + $0xc4] sm:$0xf]
    %v235 = vld [vmem:[%s3 + $0xc8] sm:$0xf]
    %v236 = vld [vmem:[%s3 + $0xcc] sm:$0xf]
    %v237 = vld [vmem:[%s3 + $0xd0] sm:$0xf]
    %v238 = vld [vmem:[%s3 + $0xd4] sm:$0xf]
    %v239 = vld [vmem:[%s3 + $0xd8] sm:$0xf]
    %v240 = vld [vmem:[%s3 + $0xdc] sm:$0xf]
    %v241 = vld [vmem:[%s3 + $0xe0] sm:$0xf]
    %v242 = vld [vmem:[%s3 + $0xe4] sm:$0xf]
    %v243 = vld [vmem:[%s3 + $0xe8] sm:$0xf]
    %v244 = vld [vmem:[%s3 + $0xec] sm:$0xf]
    %v245 = vld [vmem:[%s3 + $0xf0] sm:$0xf]
    %v246 = vld [vmem:[%s3 + $0xf4] sm:$0xf]
    %v247 = vld [vmem:[%s3 + $0xf8] sm:$0xf]
    %v248 = vld [vmem:[%s3 + $0xfc] sm:$0xf]
    %v249 = vld [vmem:[%s3 + $0x100] sm:$0xf]
    %v250 = vld [vmem:[%s3 + $0x104] sm:$0xf]
    %v251 = vld [vmem:[%s3 + $0x108] sm:$0xf]
    %v252 = vld [vmem:[%s3 + $0x10c] sm:$0xf]
    %v253 = vld [vmem:[%s3 + $0x110] sm:$0xf]
    %v254 = vld [vmem:[%s3 + $0x114] sm:$0xf]
    %v255 = vld [vmem:[%s3 + $0x118] sm:$0xf]
    %v256 = vld [vmem:[%s3 + $0x11c] sm:$0xf]
    %v257 = vld [vmem:[%s3 + $0x120] sm:$0xf]
    %v258 = vld [vmem:[%s3 + $0x124] sm:$0xf]
    %v259 = vld [vmem:[%s3 + $0x128] sm:$0xf]
    %v260 = vld [vmem:[%s3 + $0x12c] sm:$0xf]
    %v261 = vld [vmem:[%s3 + $0x130] sm:$0xf]
    %v262 = vld [vmem:[%s3 + $0x134] sm:$0xf]
    %v263 = vld [vmem:[%s3 + $0x138] sm:$0xf]
    %v264 = vld [vmem:[%s3 + $0x13c] sm:$0xf]
    %v265 = vld [vmem:[%s3 + $0x140] sm:$0xf]
    %v266 = vld [vmem:[%s3 + $0x144] sm:$0xf]
    %v267 = vld [vmem:[%s3 + $0x148] sm:$0xf]
    %v268 = vld [vmem:[%s3 + $0x14c] sm:$0xf]
    %v269 = vld [vmem:[%s3 + $0x150] sm:$0xf]
    %v270 = vld [vmem:[%s3 + $0x154] sm:$0xf]
    %v271 = vld [vmem:[%s3 + $0x158] sm:$0xf]
    %v272 = vld [vmem:[%s3 + $0x15c] sm:$0xf]
    %v273 = vld [vmem:[%s3 + $0x160] sm:$0xf]
    %v274 = vld [vmem:[%s3 + $0x164] sm:$0xf]
    %v275 = vld [vmem:[%s3 + $0x168] sm:$0xf]
    %v276 = vld [vmem:[%s3 + $0x16c] sm:$0xf]
    %v277 = vld [vmem:[%s3 + $0x170] sm:$0xf]
    %v278 = vld [vmem:[%s3 + $0x174] sm:$0xf]
    %v279 = vld [vmem:[%s3 + $0x178] sm:$0xf]
    %v280 = vld [vmem:[%s3 + $0x17c] sm:$0xf]
    %v281 = vld [vmem:[%s3 + $0x180] sm:$0xf]
    %v282 = vld [vmem:[%s3 + $0x184] sm:$0xf]
    %v283 = vld [vmem:[%s3 + $0x188] sm:$0xf]
    %v284 = vld [vmem:[%s3 + $0x18c] sm:$0xf]
    %v285 = vld [vmem:[%s3 + $0x190] sm:$0xf]
    %v286 = vld [vmem:[%s3 + $0x194] sm:$0xf]
    %v287 = vld [vmem:[%s3 + $0x198] sm:$0xf]
    %v288 = vld [vmem:[%s3 + $0x19c] sm:$0xf]
    %v289 = vld [vmem:[%s3 + $0x1a0] sm:$0xf]
    %v290 = vld [vmem:[%s3 + $0x1a4] sm:$0xf]
    %v291 = vld [vmem:[%s3 + $0x1a8] sm:$0xf]
    %v292 = vld [vmem:[%s3 + $0x1ac] sm:$0xf]
    %v293 = vld [vmem:[%s3 + $0x1b0] sm:$0xf]
    %v294 = vld [vmem:[%s3 + $0x1b4] sm:$0xf]
    %v295 = vld [vmem:[%s3 + $0x1b8] sm:$0xf]
    %v296 = vld [vmem:[%s3 + $0x1bc] sm:$0xf]
    %v297 = vld [vmem:[%s3 + $0x1c0] sm:$0xf]
    %v298 = vld [vmem:[%s3 + $0x1c4] sm:$0xf]
    %v299 = vld [vmem:[%s3 + $0x1c8] sm:$0xf]
    %v300 = vld [vmem:[%s3 + $0x1cc] sm:$0xf]
    %v301 = vld [vmem:[%s3 + $0x1d0] sm:$0xf]
    %v302 = vld [vmem:[%s3 + $0x1d4] sm:$0xf]
    %v303 = vld [vmem:[%s3 + $0x1d8] sm:$0xf]
    %v304 = vld [vmem:[%s3 + $0x1dc] sm:$0xf]
    %v305 = vld [vmem:[%s3 + $0x1e0] sm:$0xf]
    %v306 = vld [vmem:[%s3 + $0x1e4] sm:$0xf]
    %v307 = vld [vmem:[%s3 + $0x1e8] sm:$0xf]
    %v308 = vld [vmem:[%s3 + $0x1ec] sm:$0xf]
    %v309 = vld [vmem:[%s3 + $0x1f0] sm:$0xf]
    %v310 = vld [vmem:[%s3 + $0x1f4] sm:$0xf]
    %v311 = vld [vmem:[%s3 + $0x1f8] sm:$0xf]
    %v312 = vld [vmem:[%s3 + $0x1fc] sm:$0xf]
    %v313 = vld [vmem:[%s3 + $0x200] sm:$0xf]
    %v314 = vld [vmem:[%s3 + $0x204] sm:$0xf]
    %v315 = vld [vmem:[%s3 + $0x208] sm:$0xf]
    %v316 = vld [vmem:[%s3 + $0x20c] sm:$0x1]
    %v322 = vunpack.c.l.b16 %v48
    %v323 = vunpack.c.h.b16 %v48
    %v324 = vunpack.c.l.b16 %v49
    %v325 = vunpack.c.h.b16 %v49
    %v326 = vunpack.c.l.b16 %v50
    %v327 = vunpack.c.h.b16 %v50
    %v328 = vunpack.c.l.b16 %v51
    %v329 = vunpack.c.h.b16 %v51
    %v330 = vunpack.c.l.b16 %v52
    %v331 = vpack.c.b16 %v322, %v322
    %v332 = vpack.c.b16 %v323, %v323
    %v333 = vpack.c.b16 %v324, %v324
    %v334 = vpack.c.b16 %v325, %v325
    %v335 = vpack.c.b16 %v326, %v326
    %v336 = vpack.c.b16 %v327, %v327
    %v337 = vpack.c.b16 %v328, %v328
    %v338 = vpack.c.b16 %v329, %v329
    %v339 = vpack.c.b16 %v330, %v330
    %v480 = vunpack.c.l.b16 %v185
    %v481 = vunpack.c.l.b16 %v186
    %v482 = vunpack.c.l.b16 %v187
    %v483 = vunpack.c.l.b16 %v188
    %v484 = vunpack.c.l.b16 %v189
    %v485 = vunpack.c.l.b16 %v190
    %v486 = vunpack.c.l.b16 %v191
    %v487 = vunpack.c.l.b16 %v192
    %v488 = vunpack.c.l.b16 %v193
    %v489 = vunpack.c.l.b16 %v194
    %v490 = vunpack.c.l.b16 %v195
    %v491 = vunpack.c.l.b16 %v196
    %v492 = vunpack.c.l.b16 %v197
    %v493 = vunpack.c.l.b16 %v198
    %v494 = vunpack.c.l.b16 %v199
    %v495 = vunpack.c.l.b16 %v200
    %v496 = vunpack.c.l.b16 %v201
    %v497 = vunpack.c.l.b16 %v202
    %v498 = vunpack.c.l.b16 %v203
    %v499 = vunpack.c.l.b16 %v204
    %v500 = vunpack.c.l.b16 %v205
    %v501 = vunpack.c.l.b16 %v206
    %v502 = vunpack.c.l.b16 %v207
    %v503 = vunpack.c.l.b16 %v208
    %v504 = vunpack.c.l.b16 %v209
    %v505 = vunpack.c.l.b16 %v210
    %v506 = vunpack.c.l.b16 %v211
    %v507 = vunpack.c.l.b16 %v212
    %v508 = vunpack.c.l.b16 %v213
    %v509 = vunpack.c.l.b16 %v214
    %v510 = vunpack.c.l.b16 %v215
    %v511 = vunpack.c.l.b16 %v216
    %v512 = vunpack.c.l.b16 %v217
    %v513 = vunpack.c.l.b16 %v218
    %v514 = vunpack.c.l.b16 %v219
    %v515 = vunpack.c.l.b16 %v220
    %v516 = vunpack.c.l.b16 %v221
    %v517 = vunpack.c.l.b16 %v222
    %v518 = vunpack.c.l.b16 %v223
    %v519 = vunpack.c.l.b16 %v224
    %v520 = vunpack.c.l.b16 %v225
    %v521 = vunpack.c.l.b16 %v226
    %v522 = vunpack.c.l.b16 %v227
    %v523 = vunpack.c.l.b16 %v228
    %v524 = vunpack.c.l.b16 %v229
    %v525 = vunpack.c.l.b16 %v230
    %v526 = vunpack.c.l.b16 %v231
    %v527 = vunpack.c.l.b16 %v232
    %v528 = vunpack.c.l.b16 %v233
    %v529 = vunpack.c.l.b16 %v234
    %v530 = vunpack.c.l.b16 %v235
    %v531 = vunpack.c.l.b16 %v236
    %v532 = vunpack.c.l.b16 %v237
    %v533 = vunpack.c.l.b16 %v238
    %v534 = vunpack.c.l.b16 %v239
    %v535 = vunpack.c.l.b16 %v240
    %v536 = vunpack.c.l.b16 %v241
    %v537 = vunpack.c.l.b16 %v242
    %v538 = vunpack.c.l.b16 %v243
    %v539 = vunpack.c.l.b16 %v244
    %v540 = vunpack.c.l.b16 %v245
    %v541 = vunpack.c.l.b16 %v246
    %v542 = vunpack.c.l.b16 %v247
    %v543 = vunpack.c.l.b16 %v248
    %v544 = vunpack.c.l.b16 %v249
    %v545 = vunpack.c.l.b16 %v250
    %v546 = vunpack.c.l.b16 %v251
    %v547 = vunpack.c.l.b16 %v252
    %v548 = vunpack.c.l.b16 %v253
    %v549 = vunpack.c.l.b16 %v254
    %v550 = vunpack.c.l.b16 %v255
    %v551 = vunpack.c.l.b16 %v256
    %v552 = vunpack.c.l.b16 %v257
    %v553 = vunpack.c.l.b16 %v258
    %v554 = vunpack.c.l.b16 %v259
    %v555 = vunpack.c.l.b16 %v260
    %v556 = vunpack.c.l.b16 %v261
    %v557 = vunpack.c.l.b16 %v262
    %v558 = vunpack.c.l.b16 %v263
    %v559 = vunpack.c.l.b16 %v264
    %v560 = vunpack.c.l.b16 %v265
    %v561 = vunpack.c.l.b16 %v266
    %v562 = vunpack.c.l.b16 %v267
    %v563 = vunpack.c.l.b16 %v268
    %v564 = vunpack.c.l.b16 %v269
    %v565 = vunpack.c.l.b16 %v270
    %v566 = vunpack.c.l.b16 %v271
    %v567 = vunpack.c.l.b16 %v272
    %v568 = vunpack.c.l.b16 %v273
    %v569 = vunpack.c.l.b16 %v274
    %v570 = vunpack.c.l.b16 %v275
    %v571 = vunpack.c.l.b16 %v276
    %v572 = vunpack.c.l.b16 %v277
    %v573 = vunpack.c.l.b16 %v278
    %v574 = vunpack.c.l.b16 %v279
    %v575 = vunpack.c.l.b16 %v280
    %v576 = vunpack.c.l.b16 %v281
    %v577 = vunpack.c.l.b16 %v282
    %v578 = vunpack.c.l.b16 %v283
    %v579 = vunpack.c.l.b16 %v284
    %v580 = vunpack.c.l.b16 %v285
    %v581 = vunpack.c.l.b16 %v286
    %v582 = vunpack.c.l.b16 %v287
    %v583 = vunpack.c.l.b16 %v288
    %v584 = vunpack.c.l.b16 %v289
    %v585 = vunpack.c.l.b16 %v290
    %v586 = vunpack.c.l.b16 %v291
    %v587 = vunpack.c.l.b16 %v292
    %v588 = vunpack.c.l.b16 %v293
    %v589 = vunpack.c.l.b16 %v294
    %v590 = vunpack.c.l.b16 %v295
    %v591 = vunpack.c.l.b16 %v296
    %v592 = vunpack.c.l.b16 %v297
    %v593 = vunpack.c.l.b16 %v298
    %v594 = vunpack.c.l.b16 %v299
    %v595 = vunpack.c.l.b16 %v300
    %v596 = vunpack.c.l.b16 %v301
    %v597 = vunpack.c.l.b16 %v302
    %v598 = vunpack.c.l.b16 %v303
    %v599 = vunpack.c.l.b16 %v304
    %v600 = vunpack.c.l.b16 %v305
    %v601 = vunpack.c.l.b16 %v306
    %v602 = vunpack.c.l.b16 %v307
    %v603 = vunpack.c.l.b16 %v308
    %v604 = vunpack.c.l.b16 %v309
    %v605 = vunpack.c.l.b16 %v310
    %v606 = vunpack.c.l.b16 %v311
    %v607 = vunpack.c.l.b16 %v312
    %v608 = vunpack.c.l.b16 %v313
    %v609 = vunpack.c.l.b16 %v314
    %v610 = vunpack.c.l.b16 %v315
    %v611 = vunpack.c.l.b16 %v316
    %v612 = vpack.c.b16 %v481, %v480
    %v613 = vpack.c.b16 %v483, %v482
    %v614 = vpack.c.b16 %v485, %v484
    %v615 = vpack.c.b16 %v487, %v486
    %v616 = vpack.c.b16 %v489, %v488
    %v617 = vpack.c.b16 %v491, %v490
    %v618 = vpack.c.b16 %v493, %v492
    %v619 = vpack.c.b16 %v495, %v494
    %v620 = vpack.c.b16 %v497, %v496
    %v621 = vpack.c.b16 %v499, %v498
    %v622 = vpack.c.b16 %v501, %v500
    %v623 = vpack.c.b16 %v503, %v502
    %v624 = vpack.c.b16 %v505, %v504
    %v625 = vpack.c.b16 %v507, %v506
    %v626 = vpack.c.b16 %v509, %v508
    %v627 = vpack.c.b16 %v511, %v510
    %v628 = vpack.c.b16 %v513, %v512
    %v629 = vpack.c.b16 %v515, %v514
    %v630 = vpack.c.b16 %v517, %v516
    %v631 = vpack.c.b16 %v519, %v518
    %v632 = vpack.c.b16 %v521, %v520
    %v633 = vpack.c.b16 %v523, %v522
    %v634 = vpack.c.b16 %v525, %v524
    %v635 = vpack.c.b16 %v527, %v526
    %v636 = vpack.c.b16 %v529, %v528
    %v637 = vpack.c.b16 %v531, %v530
    %v638 = vpack.c.b16 %v533, %v532
    %v639 = vpack.c.b16 %v535, %v534
    %v640 = vpack.c.b16 %v537, %v536
    %v641 = vpack.c.b16 %v539, %v538
    %v642 = vpack.c.b16 %v541, %v540
    %v643 = vpack.c.b16 %v543, %v542
    %v644 = vpack.c.b16 %v545, %v544
    %v645 = vpack.c.b16 %v547, %v546
    %v646 = vpack.c.b16 %v549, %v548
    %v647 = vpack.c.b16 %v551, %v550
    %v648 = vpack.c.b16 %v553, %v552
    %v649 = vpack.c.b16 %v555, %v554
    %v650 = vpack.c.b16 %v557, %v556
    %v651 = vpack.c.b16 %v559, %v558
    %v652 = vpack.c.b16 %v561, %v560
    %v653 = vpack.c.b16 %v563, %v562
    %v654 = vpack.c.b16 %v565, %v564
    %v655 = vpack.c.b16 %v567, %v566
    %v656 = vpack.c.b16 %v569, %v568
    %v657 = vpack.c.b16 %v571, %v570
    %v658 = vpack.c.b16 %v573, %v572
    %v659 = vpack.c.b16 %v575, %v574
    %v660 = vpack.c.b16 %v577, %v576
    %v661 = vpack.c.b16 %v579, %v578
    %v662 = vpack.c.b16 %v581, %v580
    %v663 = vpack.c.b16 %v583, %v582
    %v664 = vpack.c.b16 %v585, %v584
    %v665 = vpack.c.b16 %v587, %v586
    %v666 = vpack.c.b16 %v589, %v588
    %v667 = vpack.c.b16 %v591, %v590
    %v668 = vpack.c.b16 %v593, %v592
    %v669 = vpack.c.b16 %v595, %v594
    %v670 = vpack.c.b16 %v597, %v596
    %v671 = vpack.c.b16 %v599, %v598
    %v672 = vpack.c.b16 %v601, %v600
    %v673 = vpack.c.b16 %v603, %v602
    %v674 = vpack.c.b16 %v605, %v604
    %v675 = vpack.c.b16 %v607, %v606
    %v676 = vpack.c.b16 %v609, %v608
    %v677 = vpack.c.b16 %v611, %v610
    %vm743 = vcmask 211968
    %v745 = vsel %vm743, %v339, 0
    %vm747 = vcmask 1044480
    %v749 = vsel %vm747, %v677, 0
    %751 = vmatprep.subr.bf16.mxu0 0
    %752 = vmatpush1.bf16.msra.mxu0 %v612
    %753 = vmatprep.subr.bf16.mxu0 0
    %754 = vmatpush1.bf16.msra.mxu0 %v613
    %755 = vmatprep.subr.bf16.mxu0 0
    %756 = vmatpush1.bf16.msra.mxu0 %v614
    %757 = vmatprep.subr.bf16.mxu0 0
    %758 = vmatpush1.bf16.msra.mxu0 %v615
    %759 = vmatprep.subr.bf16.mxu0 0
    %760 = vmatpush1.bf16.msra.mxu0 %v616
    %761 = vmatprep.subr.bf16.mxu0 0
    %762 = vmatpush1.bf16.msra.mxu0 %v617
    %763 = vmatprep.subr.bf16.mxu0 0
    %764 = vmatpush1.bf16.msra.mxu0 %v618
    %765 = vmatprep.subr.bf16.mxu0 0
    %766 = vmatpush1.bf16.msra.mxu0 %v619
    %767 = vmatprep.subr.bf16.mxu0 0
    %768 = vmatpush1.bf16.msra.mxu0 %v620
    %769 = vmatprep.subr.bf16.mxu0 0
    %770 = vmatpush1.bf16.msra.mxu0 %v621
    %771 = vmatprep.subr.bf16.mxu0 0
    %772 = vmatpush1.bf16.msra.mxu0 %v622
    %773 = vmatprep.subr.bf16.mxu0 0
    %774 = vmatpush1.bf16.msra.mxu0 %v623
    %775 = vmatprep.subr.bf16.mxu0 0
    %776 = vmatpush1.bf16.msra.mxu0 %v624
    %777 = vmatprep.subr.bf16.mxu0 0
    %778 = vmatpush1.bf16.msra.mxu0 %v625
    %779 = vmatprep.subr.bf16.mxu0 0
    %780 = vmatpush1.bf16.msra.mxu0 %v626
    %781 = vmatprep.subr.bf16.mxu0 0
    %782 = vmatpush1.bf16.msra.mxu0 %v627
    %783 = vmatprep.mubr.bf16.mxu0 %v332
    %784 = vmatmul.mubr.bf16.gmra.mrb[0].mxu0 %v331
    %v785 = vpop.f32.mrb[0].mxu0
    %v786 = vadd.f32 0.0, %v785
    %v787 = vpop.f32.mrb[0].mxu0
    %v788 = vpop.f32.mrb[0].mxu0
    %v789 = vpop.f32.mrb[0].mxu0
    %790 = vdwg.mxu0
    %791 = vmatprep.subr.bf16.mxu0 0
    %792 = vmatpush1.bf16.msra.mxu0 %v628
    %793 = vmatprep.subr.bf16.mxu0 0
    %794 = vmatpush1.bf16.msra.mxu0 %v629
    %795 = vmatprep.subr.bf16.mxu0 0
    %796 = vmatpush1.bf16.msra.mxu0 %v630
    %797 = vmatprep.subr.bf16.mxu0 0
    %798 = vmatpush1.bf16.msra.mxu0 %v631
    %799 = vmatprep.subr.bf16.mxu0 0
    %800 = vmatpush1.bf16.msra.mxu0 %v632
    %801 = vmatprep.subr.bf16.mxu0 0
    %802 = vmatpush1.bf16.msra.mxu0 %v633
    %803 = vmatprep.subr.bf16.mxu0 0
    %804 = vmatpush1.bf16.msra.mxu0 %v634
    %805 = vmatprep.subr.bf16.mxu0 0
    %806 = vmatpush1.bf16.msra.mxu0 %v635
    %807 = vmatprep.subr.bf16.mxu0 0
    %808 = vmatpush1.bf16.msra.mxu0 %v636
    %809 = vmatprep.subr.bf16.mxu0 0
    %810 = vmatpush1.bf16.msra.mxu0 %v637
    %811 = vmatprep.subr.bf16.mxu0 0
    %812 = vmatpush1.bf16.msra.mxu0 %v638
    %813 = vmatprep.subr.bf16.mxu0 0
    %814 = vmatpush1.bf16.msra.mxu0 %v639
    %815 = vmatprep.subr.bf16.mxu0 0
    %816 = vmatpush1.bf16.msra.mxu0 %v640
    %817 = vmatprep.subr.bf16.mxu0 0
    %818 = vmatpush1.bf16.msra.mxu0 %v641
    %819 = vmatprep.subr.bf16.mxu0 0
    %820 = vmatpush1.bf16.msra.mxu0 %v642
    %821 = vmatprep.subr.bf16.mxu0 0
    %822 = vmatpush1.bf16.msra.mxu0 %v643
    %823 = vmatprep.mubr.bf16.mxu0 %v334
    %824 = vmatmul.mubr.bf16.gmra.mrb[0].mxu0 %v333
    %v825 = vpop.f32.mrb[0].mxu0
    %v826 = vadd.f32 %v786, %v825
    %v827 = vpop.f32.mrb[0].mxu0
    %v828 = vpop.f32.mrb[0].mxu0
    %v829 = vpop.f32.mrb[0].mxu0
    %830 = vdwg.mxu0
    %831 = vmatprep.subr.bf16.mxu0 0
    %832 = vmatpush1.bf16.msra.mxu0 %v644
    %833 = vmatprep.subr.bf16.mxu0 0
    %834 = vmatpush1.bf16.msra.mxu0 %v645
    %835 = vmatprep.subr.bf16.mxu0 0
    %836 = vmatpush1.bf16.msra.mxu0 %v646
    %837 = vmatprep.subr.bf16.mxu0 0
    %838 = vmatpush1.bf16.msra.mxu0 %v647
    %839 = vmatprep.subr.bf16.mxu0 0
    %840 = vmatpush1.bf16.msra.mxu0 %v648
    %841 = vmatprep.subr.bf16.mxu0 0
    %842 = vmatpush1.bf16.msra.mxu0 %v649
    %843 = vmatprep.subr.bf16.mxu0 0
    %844 = vmatpush1.bf16.msra.mxu0 %v650
    %845 = vmatprep.subr.bf16.mxu0 0
    %846 = vmatpush1.bf16.msra.mxu0 %v651
    %847 = vmatprep.subr.bf16.mxu0 0
    %848 = vmatpush1.bf16.msra.mxu0 %v652
    %849 = vmatprep.subr.bf16.mxu0 0
    %850 = vmatpush1.bf16.msra.mxu0 %v653
    %851 = vmatprep.subr.bf16.mxu0 0
    %852 = vmatpush1.bf16.msra.mxu0 %v654
    %853 = vmatprep.subr.bf16.mxu0 0
    %854 = vmatpush1.bf16.msra.mxu0 %v655
    %855 = vmatprep.subr.bf16.mxu0 0
    %856 = vmatpush1.bf16.msra.mxu0 %v656
    %857 = vmatprep.subr.bf16.mxu0 0
    %858 = vmatpush1.bf16.msra.mxu0 %v657
    %859 = vmatprep.subr.bf16.mxu0 0
    %860 = vmatpush1.bf16.msra.mxu0 %v658
    %861 = vmatprep.subr.bf16.mxu0 0
    %862 = vmatpush1.bf16.msra.mxu0 %v659
    %863 = vmatprep.mubr.bf16.mxu0 %v336
    %864 = vmatmul.mubr.bf16.gmra.mrb[0].mxu0 %v335
    %v865 = vpop.f32.mrb[0].mxu0
    %v866 = vadd.f32 %v826, %v865
    %v867 = vpop.f32.mrb[0].mxu0
    %v868 = vpop.f32.mrb[0].mxu0
    %v869 = vpop.f32.mrb[0].mxu0
    %870 = vdwg.mxu0
    %871 = vmatprep.subr.bf16.mxu0 0
    %872 = vmatpush1.bf16.msra.mxu0 %v660
    %873 = vmatprep.subr.bf16.mxu0 0
    %874 = vmatpush1.bf16.msra.mxu0 %v661
    %875 = vmatprep.subr.bf16.mxu0 0
    %876 = vmatpush1.bf16.msra.mxu0 %v662
    %877 = vmatprep.subr.bf16.mxu0 0
    %878 = vmatpush1.bf16.msra.mxu0 %v663
    %879 = vmatprep.subr.bf16.mxu0 0
    %880 = vmatpush1.bf16.msra.mxu0 %v664
    %881 = vmatprep.subr.bf16.mxu0 0
    %882 = vmatpush1.bf16.msra.mxu0 %v665
    %883 = vmatprep.subr.bf16.mxu0 0
    %884 = vmatpush1.bf16.msra.mxu0 %v666
    %885 = vmatprep.subr.bf16.mxu0 0
    %886 = vmatpush1.bf16.msra.mxu0 %v667
    %887 = vmatprep.subr.bf16.mxu0 0
    %888 = vmatpush1.bf16.msra.mxu0 %v668
    %889 = vmatprep.subr.bf16.mxu0 0
    %890 = vmatpush1.bf16.msra.mxu0 %v669
    %891 = vmatprep.subr.bf16.mxu0 0
    %892 = vmatpush1.bf16.msra.mxu0 %v670
    %893 = vmatprep.subr.bf16.mxu0 0
    %894 = vmatpush1.bf16.msra.mxu0 %v671
    %895 = vmatprep.subr.bf16.mxu0 0
    %896 = vmatpush1.bf16.msra.mxu0 %v672
    %897 = vmatprep.subr.bf16.mxu0 0
    %898 = vmatpush1.bf16.msra.mxu0 %v673
    %899 = vmatprep.subr.bf16.mxu0 0
    %900 = vmatpush1.bf16.msra.mxu0 %v674
    %901 = vmatprep.subr.bf16.mxu0 0
    %902 = vmatpush1.bf16.msra.mxu0 %v675
    %903 = vmatprep.mubr.bf16.mxu0 %v338
    %904 = vmatmul.mubr.bf16.gmra.mrb[0].mxu0 %v337
    %v905 = vpop.f32.mrb[0].mxu0
    %v906 = vadd.f32 %v866, %v905
    %v907 = vpop.f32.mrb[0].mxu0
    %v908 = vpop.f32.mrb[0].mxu0
    %v909 = vpop.f32.mrb[0].mxu0
    %910 = vdwg.mxu0
    %911 = vmatprep.subr.bf16.mxu0 0
    %912 = vmatpush1.bf16.msra.mxu0 %v676
    %913 = vmatprep.subr.bf16.mxu0 0
    %914 = vmatpush1.bf16.msra.mxu0 %v749
    %915 = vmatprep.subr.bf16.mxu0 0
    %916 = vmatpush1.bf16.msra.mxu0 0
    %917 = vmatprep.subr.bf16.mxu0 0
    %918 = vmatpush1.bf16.msra.mxu0 0
    %919 = vmatprep.subr.bf16.mxu0 0
    %920 = vmatpush1.bf16.msra.mxu0 0
    %921 = vmatprep.subr.bf16.mxu0 0
    %922 = vmatpush1.bf16.msra.mxu0 0
    %923 = vmatprep.subr.bf16.mxu0 0
    %924 = vmatpush1.bf16.msra.mxu0 0
    %925 = vmatprep.subr.bf16.mxu0 0
    %926 = vmatpush1.bf16.msra.mxu0 0
    %927 = vmatprep.subr.bf16.mxu0 0
    %928 = vmatpush1.bf16.msra.mxu0 0
    %929 = vmatprep.subr.bf16.mxu0 0
    %930 = vmatpush1.bf16.msra.mxu0 0
    %931 = vmatprep.subr.bf16.mxu0 0
    %932 = vmatpush1.bf16.msra.mxu0 0
    %933 = vmatprep.subr.bf16.mxu0 0
    %934 = vmatpush1.bf16.msra.mxu0 0
    %935 = vmatprep.subr.bf16.mxu0 0
    %936 = vmatpush1.bf16.msra.mxu0 0
    %937 = vmatprep.subr.bf16.mxu0 0
    %938 = vmatpush1.bf16.msra.mxu0 0
    %939 = vmatprep.subr.bf16.mxu0 0
    %940 = vmatpush1.bf16.msra.mxu0 0
    %941 = vmatprep.subr.bf16.mxu0 0
    %942 = vmatpush1.bf16.msra.mxu0 0
    %943 = vmatprep.mubr.bf16.mxu0 0
    %944 = vmatmul.mubr.bf16.gmra.mrb[0].mxu0 %v745
    %v945 = vpop.f32.mrb[0].mxu0
    %v946 = vadd.f32 %v906, %v945
    %v947 = vpop.f32.mrb[0].mxu0
    %v948 = vpop.f32.mrb[0].mxu0
    %v949 = vpop.f32.mrb[0].mxu0
    %950 = vdwg.mxu0
    %v956 = vunpack.c.l.b16 %v38
    %v957 = vunpack.c.h.b16 %v38
    %v958 = vunpack.c.l.b16 %v39
    %v959 = vunpack.c.h.b16 %v39
    %v960 = vunpack.c.l.b16 %v40
    %v961 = vunpack.c.h.b16 %v40
    %v962 = vunpack.c.l.b16 %v41
    %v963 = vunpack.c.h.b16 %v41
    %v964 = vunpack.c.l.b16 %v42
    %v965 = vpack.c.b16 %v956, %v956
    %v966 = vpack.c.b16 %v957, %v957
    %v967 = vpack.c.b16 %v958, %v958
    %v968 = vpack.c.b16 %v959, %v959
    %v969 = vpack.c.b16 %v960, %v960
    %v970 = vpack.c.b16 %v961, %v961
    %v971 = vpack.c.b16 %v962, %v962
    %v972 = vpack.c.b16 %v963, %v963
    %v973 = vpack.c.b16 %v964, %v964
    %v1114 = vunpack.c.l.b16 %v53
    %v1115 = vunpack.c.l.b16 %v54
    %v1116 = vunpack.c.l.b16 %v55
    %v1117 = vunpack.c.l.b16 %v56
    %v1118 = vunpack.c.l.b16 %v57
    %v1119 = vunpack.c.l.b16 %v58
    %v1120 = vunpack.c.l.b16 %v59
    %v1121 = vunpack.c.l.b16 %v60
    %v1122 = vunpack.c.l.b16 %v61
    %v1123 = vunpack.c.l.b16 %v62
    %v1124 = vunpack.c.l.b16 %v63
    %v1125 = vunpack.c.l.b16 %v64
    %v1126 = vunpack.c.l.b16 %v65
    %v1127 = vunpack.c.l.b16 %v66
    %v1128 = vunpack.c.l.b16 %v67
    %v1129 = vunpack.c.l.b16 %v68
    %v1130 = vunpack.c.l.b16 %v69
    %v1131 = vunpack.c.l.b16 %v70
    %v1132 = vunpack.c.l.b16 %v71
    %v1133 = vunpack.c.l.b16 %v72
    %v1134 = vunpack.c.l.b16 %v73
    %v1135 = vunpack.c.l.b16 %v74
    %v1136 = vunpack.c.l.b16 %v75
    %v1137 = vunpack.c.l.b16 %v76
    %v1138 = vunpack.c.l.b16 %v77
    %v1139 = vunpack.c.l.b16 %v78
    %v1140 = vunpack.c.l.b16 %v79
    %v1141 = vunpack.c.l.b16 %v80
    %v1142 = vunpack.c.l.b16 %v81
    %v1143 = vunpack.c.l.b16 %v82
    %v1144 = vunpack.c.l.b16 %v83
    %v1145 = vunpack.c.l.b16 %v84
    %v1146 = vunpack.c.l.b16 %v85
    %v1147 = vunpack.c.l.b16 %v86
    %v1148 = vunpack.c.l.b16 %v87
    %v1149 = vunpack.c.l.b16 %v88
    %v1150 = vunpack.c.l.b16 %v89
    %v1151 = vunpack.c.l.b16 %v90
    %v1152 = vunpack.c.l.b16 %v91
    %v1153 = vunpack.c.l.b16 %v92
    %v1154 = vunpack.c.l.b16 %v93
    %v1155 = vunpack.c.l.b16 %v94
    %v1156 = vunpack.c.l.b16 %v95
    %v1157 = vunpack.c.l.b16 %v96
    %v1158 = vunpack.c.l.b16 %v97
    %v1159 = vunpack.c.l.b16 %v98
    %v1160 = vunpack.c.l.b16 %v99
    %v1161 = vunpack.c.l.b16 %v100
    %v1162 = vunpack.c.l.b16 %v101
    %v1163 = vunpack.c.l.b16 %v102
    %v1164 = vunpack.c.l.b16 %v103
    %v1165 = vunpack.c.l.b16 %v104
    %v1166 = vunpack.c.l.b16 %v105
    %v1167 = vunpack.c.l.b16 %v106
    %v1168 = vunpack.c.l.b16 %v107
    %v1169 = vunpack.c.l.b16 %v108
    %v1170 = vunpack.c.l.b16 %v109
    %v1171 = vunpack.c.l.b16 %v110
    %v1172 = vunpack.c.l.b16 %v111
    %v1173 = vunpack.c.l.b16 %v112
    %v1174 = vunpack.c.l.b16 %v113
    %v1175 = vunpack.c.l.b16 %v114
    %v1176 = vunpack.c.l.b16 %v115
    %v1177 = vunpack.c.l.b16 %v116
    %v1178 = vunpack.c.l.b16 %v117
    %v1179 = vunpack.c.l.b16 %v118
    %v1180 = vunpack.c.l.b16 %v119
    %v1181 = vunpack.c.l.b16 %v120
    %v1182 = vunpack.c.l.b16 %v121
    %v1183 = vunpack.c.l.b16 %v122
    %v1184 = vunpack.c.l.b16 %v123
    %v1185 = vunpack.c.l.b16 %v124
    %v1186 = vunpack.c.l.b16 %v125
    %v1187 = vunpack.c.l.b16 %v126
    %v1188 = vunpack.c.l.b16 %v127
    %v1189 = vunpack.c.l.b16 %v128
    %v1190 = vunpack.c.l.b16 %v129
    %v1191 = vunpack.c.l.b16 %v130
    %v1192 = vunpack.c.l.b16 %v131
    %v1193 = vunpack.c.l.b16 %v132
    %v1194 = vunpack.c.l.b16 %v133
    %v1195 = vunpack.c.l.b16 %v134
    %v1196 = vunpack.c.l.b16 %v135
    %v1197 = vunpack.c.l.b16 %v136
    %v1198 = vunpack.c.l.b16 %v137
    %v1199 = vunpack.c.l.b16 %v138
    %v1200 = vunpack.c.l.b16 %v139
    %v1201 = vunpack.c.l.b16 %v140
    %v1202 = vunpack.c.l.b16 %v141
    %v1203 = vunpack.c.l.b16 %v142
    %v1204 = vunpack.c.l.b16 %v143
    %v1205 = vunpack.c.l.b16 %v144
    %v1206 = vunpack.c.l.b16 %v145
    %v1207 = vunpack.c.l.b16 %v146
    %v1208 = vunpack.c.l.b16 %v147
    %v1209 = vunpack.c.l.b16 %v148
    %v1210 = vunpack.c.l.b16 %v149
    %v1211 = vunpack.c.l.b16 %v150
    %v1212 = vunpack.c.l.b16 %v151
    %v1213 = vunpack.c.l.b16 %v152
    %v1214 = vunpack.c.l.b16 %v153
    %v1215 = vunpack.c.l.b16 %v154
    %v1216 = vunpack.c.l.b16 %v155
    %v1217 = vunpack.c.l.b16 %v156
    %v1218 = vunpack.c.l.b16 %v157
    %v1219 = vunpack.c.l.b16 %v158
    %v1220 = vunpack.c.l.b16 %v159
    %v1221 = vunpack.c.l.b16 %v160
    %v1222 = vunpack.c.l.b16 %v161
    %v1223 = vunpack.c.l.b16 %v162
    %v1224 = vunpack.c.l.b16 %v163
    %v1225 = vunpack.c.l.b16 %v164
    %v1226 = vunpack.c.l.b16 %v165
    %v1227 = vunpack.c.l.b16 %v166
    %v1228 = vunpack.c.l.b16 %v167
    %v1229 = vunpack.c.l.b16 %v168
    %v1230 = vunpack.c.l.b16 %v169
    %v1231 = vunpack.c.l.b16 %v170
    %v1232 = vunpack.c.l.b16 %v171
    %v1233 = vunpack.c.l.b16 %v172
    %v1234 = vunpack.c.l.b16 %v173
    %v1235 = vunpack.c.l.b16 %v174
    %v1236 = vunpack.c.l.b16 %v175
    %v1237 = vunpack.c.l.b16 %v176
    %v1238 = vunpack.c.l.b16 %v177
    %v1239 = vunpack.c.l.b16 %v178
    %v1240 = vunpack.c.l.b16 %v179
    %v1241 = vunpack.c.l.b16 %v180
    %v1242 = vunpack.c.l.b16 %v181
    %v1243 = vunpack.c.l.b16 %v182
    %v1244 = vunpack.c.l.b16 %v183
    %v1245 = vunpack.c.l.b16 %v184
    %v1246 = vpack.c.b16 %v1115, %v1114
    %v1247 = vpack.c.b16 %v1117, %v1116
    %v1248 = vpack.c.b16 %v1119, %v1118
    %v1249 = vpack.c.b16 %v1121, %v1120
    %v1250 = vpack.c.b16 %v1123, %v1122
    %v1251 = vpack.c.b16 %v1125, %v1124
    %v1252 = vpack.c.b16 %v1127, %v1126
    %v1253 = vpack.c.b16 %v1129, %v1128
    %v1254 = vpack.c.b16 %v1131, %v1130
    %v1255 = vpack.c.b16 %v1133, %v1132
    %v1256 = vpack.c.b16 %v1135, %v1134
    %v1257 = vpack.c.b16 %v1137, %v1136
    %v1258 = vpack.c.b16 %v1139, %v1138
    %v1259 = vpack.c.b16 %v1141, %v1140
    %v1260 = vpack.c.b16 %v1143, %v1142
    %v1261 = vpack.c.b16 %v1145, %v1144
    %v1262 = vpack.c.b16 %v1147, %v1146
    %v1263 = vpack.c.b16 %v1149, %v1148
    %v1264 = vpack.c.b16 %v1151, %v1150
    %v1265 = vpack.c.b16 %v1153, %v1152
    %v1266 = vpack.c.b16 %v1155, %v1154
    %v1267 = vpack.c.b16 %v1157, %v1156
    %v1268 = vpack.c.b16 %v1159, %v1158
    %v1269 = vpack.c.b16 %v1161, %v1160
    %v1270 = vpack.c.b16 %v1163, %v1162
    %v1271 = vpack.c.b16 %v1165, %v1164
    %v1272 = vpack.c.b16 %v1167, %v1166
    %v1273 = vpack.c.b16 %v1169, %v1168
    %v1274 = vpack.c.b16 %v1171, %v1170
    %v1275 = vpack.c.b16 %v1173, %v1172
    %v1276 = vpack.c.b16 %v1175, %v1174
    %v1277 = vpack.c.b16 %v1177, %v1176
    %v1278 = vpack.c.b16 %v1179, %v1178
    %v1279 = vpack.c.b16 %v1181, %v1180
    %v1280 = vpack.c.b16 %v1183, %v1182
    %v1281 = vpack.c.b16 %v1185, %v1184
    %v1282 = vpack.c.b16 %v1187, %v1186
    %v1283 = vpack.c.b16 %v1189, %v1188
    %v1284 = vpack.c.b16 %v1191, %v1190
    %v1285 = vpack.c.b16 %v1193, %v1192
    %v1286 = vpack.c.b16 %v1195, %v1194
    %v1287 = vpack.c.b16 %v1197, %v1196
    %v1288 = vpack.c.b16 %v1199, %v1198
    %v1289 = vpack.c.b16 %v1201, %v1200
    %v1290 = vpack.c.b16 %v1203, %v1202
    %v1291 = vpack.c.b16 %v1205, %v1204
    %v1292 = vpack.c.b16 %v1207, %v1206
    %v1293 = vpack.c.b16 %v1209, %v1208
    %v1294 = vpack.c.b16 %v1211, %v1210
    %v1295 = vpack.c.b16 %v1213, %v1212
    %v1296 = vpack.c.b16 %v1215, %v1214
    %v1297 = vpack.c.b16 %v1217, %v1216
    %v1298 = vpack.c.b16 %v1219, %v1218
    %v1299 = vpack.c.b16 %v1221, %v1220
    %v1300 = vpack.c.b16 %v1223, %v1222
    %v1301 = vpack.c.b16 %v1225, %v1224
    %v1302 = vpack.c.b16 %v1227, %v1226
    %v1303 = vpack.c.b16 %v1229, %v1228
    %v1304 = vpack.c.b16 %v1231, %v1230
    %v1305 = vpack.c.b16 %v1233, %v1232
    %v1306 = vpack.c.b16 %v1235, %v1234
    %v1307 = vpack.c.b16 %v1237, %v1236
    %v1308 = vpack.c.b16 %v1239, %v1238
    %v1309 = vpack.c.b16 %v1241, %v1240
    %v1310 = vpack.c.b16 %v1243, %v1242
    %v1311 = vpack.c.b16 %v1245, %v1244
    %v1378 = vsel %vm743, %v973, 0
    %v1381 = vsel %vm747, %v1311, 0
    %1383 = vmatprep.subr.bf16.mxu0 0
    %1384 = vmatpush1.bf16.msra.mxu0 %v1246
    %1385 = vmatprep.subr.bf16.mxu0 0
    %1386 = vmatpush1.bf16.msra.mxu0 %v1247
    %1387 = vmatprep.subr.bf16.mxu0 0
    %1388 = vmatpush1.bf16.msra.mxu0 %v1248
    %1389 = vmatprep.subr.bf16.mxu0 0
    %1390 = vmatpush1.bf16.msra.mxu0 %v1249
    %1391 = vmatprep.subr.bf16.mxu0 0
    %1392 = vmatpush1.bf16.msra.mxu0 %v1250
    %1393 = vmatprep.subr.bf16.mxu0 0
    %1394 = vmatpush1.bf16.msra.mxu0 %v1251
    %1395 = vmatprep.subr.bf16.mxu0 0
    %1396 = vmatpush1.bf16.msra.mxu0 %v1252
    %1397 = vmatprep.subr.bf16.mxu0 0
    %1398 = vmatpush1.bf16.msra.mxu0 %v1253
    %1399 = vmatprep.subr.bf16.mxu0 0
    %1400 = vmatpush1.bf16.msra.mxu0 %v1254
    %1401 = vmatprep.subr.bf16.mxu0 0
    %1402 = vmatpush1.bf16.msra.mxu0 %v1255
    %1403 = vmatprep.subr.bf16.mxu0 0
    %1404 = vmatpush1.bf16.msra.mxu0 %v1256
    %1405 = vmatprep.subr.bf16.mxu0 0
    %1406 = vmatpush1.bf16.msra.mxu0 %v1257
    %1407 = vmatprep.subr.bf16.mxu0 0
    %1408 = vmatpush1.bf16.msra.mxu0 %v1258
    %1409 = vmatprep.subr.bf16.mxu0 0
    %1410 = vmatpush1.bf16.msra.mxu0 %v1259
    %1411 = vmatprep.subr.bf16.mxu0 0
    %1412 = vmatpush1.bf16.msra.mxu0 %v1260
    %1413 = vmatprep.subr.bf16.mxu0 0
    %1414 = vmatpush1.bf16.msra.mxu0 %v1261
    %1415 = vmatprep.mubr.bf16.mxu0 %v966
    %1416 = vmatmul.mubr.bf16.gmra.mrb[0].mxu0 %v965
    %v1417 = vpop.f32.mrb[0].mxu0
    %v1418 = vadd.f32 %v946, %v1417
    %v1419 = vpop.f32.mrb[0].mxu0
    %v1420 = vpop.f32.mrb[0].mxu0
    %v1421 = vpop.f32.mrb[0].mxu0
    %1422 = vdwg.mxu0
    %1423 = vmatprep.subr.bf16.mxu0 0
    %1424 = vmatpush1.bf16.msra.mxu0 %v1262
    %1425 = vmatprep.subr.bf16.mxu0 0
    %1426 = vmatpush1.bf16.msra.mxu0 %v1263
    %1427 = vmatprep.subr.bf16.mxu0 0
    %1428 = vmatpush1.bf16.msra.mxu0 %v1264
    %1429 = vmatprep.subr.bf16.mxu0 0
    %1430 = vmatpush1.bf16.msra.mxu0 %v1265
    %1431 = vmatprep.subr.bf16.mxu0 0
    %1432 = vmatpush1.bf16.msra.mxu0 %v1266
    %1433 = vmatprep.subr.bf16.mxu0 0
    %1434 = vmatpush1.bf16.msra.mxu0 %v1267
    %1435 = vmatprep.subr.bf16.mxu0 0
    %1436 = vmatpush1.bf16.msra.mxu0 %v1268
    %1437 = vmatprep.subr.bf16.mxu0 0
    %1438 = vmatpush1.bf16.msra.mxu0 %v1269
    %1439 = vmatprep.subr.bf16.mxu0 0
    %1440 = vmatpush1.bf16.msra.mxu0 %v1270
    %1441 = vmatprep.subr.bf16.mxu0 0
    %1442 = vmatpush1.bf16.msra.mxu0 %v1271
    %1443 = vmatprep.subr.bf16.mxu0 0
    %1444 = vmatpush1.bf16.msra.mxu0 %v1272
    %1445 = vmatprep.subr.bf16.mxu0 0
    %1446 = vmatpush1.bf16.msra.mxu0 %v1273
    %1447 = vmatprep.subr.bf16.mxu0 0
    %1448 = vmatpush1.bf16.msra.mxu0 %v1274
    %1449 = vmatprep.subr.bf16.mxu0 0
    %1450 = vmatpush1.bf16.msra.mxu0 %v1275
    %1451 = vmatprep.subr.bf16.mxu0 0
    %1452 = vmatpush1.bf16.msra.mxu0 %v1276
    %1453 = vmatprep.subr.bf16.mxu0 0
    %1454 = vmatpush1.bf16.msra.mxu0 %v1277
    %1455 = vmatprep.mubr.bf16.mxu0 %v968
    %1456 = vmatmul.mubr.bf16.gmra.mrb[0].mxu0 %v967
    %v1457 = vpop.f32.mrb[0].mxu0
    %v1458 = vadd.f32 %v1418, %v1457
    %v1459 = vpop.f32.mrb[0].mxu0
    %v1460 = vpop.f32.mrb[0].mxu0
    %v1461 = vpop.f32.mrb[0].mxu0
    %1462 = vdwg.mxu0
    %1463 = vmatprep.subr.bf16.mxu0 0
    %1464 = vmatpush1.bf16.msra.mxu0 %v1278
    %1465 = vmatprep.subr.bf16.mxu0 0
    %1466 = vmatpush1.bf16.msra.mxu0 %v1279
    %1467 = vmatprep.subr.bf16.mxu0 0
    %1468 = vmatpush1.bf16.msra.mxu0 %v1280
    %1469 = vmatprep.subr.bf16.mxu0 0
    %1470 = vmatpush1.bf16.msra.mxu0 %v1281
    %1471 = vmatprep.subr.bf16.mxu0 0
    %1472 = vmatpush1.bf16.msra.mxu0 %v1282
    %1473 = vmatprep.subr.bf16.mxu0 0
    %1474 = vmatpush1.bf16.msra.mxu0 %v1283
    %1475 = vmatprep.subr.bf16.mxu0 0
    %1476 = vmatpush1.bf16.msra.mxu0 %v1284
    %1477 = vmatprep.subr.bf16.mxu0 0
    %1478 = vmatpush1.bf16.msra.mxu0 %v1285
    %1479 = vmatprep.subr.bf16.mxu0 0
    %1480 = vmatpush1.bf16.msra.mxu0 %v1286
    %1481 = vmatprep.subr.bf16.mxu0 0
    %1482 = vmatpush1.bf16.msra.mxu0 %v1287
    %1483 = vmatprep.subr.bf16.mxu0 0
    %1484 = vmatpush1.bf16.msra.mxu0 %v1288
    %1485 = vmatprep.subr.bf16.mxu0 0
    %1486 = vmatpush1.bf16.msra.mxu0 %v1289
    %1487 = vmatprep.subr.bf16.mxu0 0
    %1488 = vmatpush1.bf16.msra.mxu0 %v1290
    %1489 = vmatprep.subr.bf16.mxu0 0
    %1490 = vmatpush1.bf16.msra.mxu0 %v1291
    %1491 = vmatprep.subr.bf16.mxu0 0
    %1492 = vmatpush1.bf16.msra.mxu0 %v1292
    %1493 = vmatprep.subr.bf16.mxu0 0
    %1494 = vmatpush1.bf16.msra.mxu0 %v1293
    %1495 = vmatprep.mubr.bf16.mxu0 %v970
    %1496 = vmatmul.mubr.bf16.gmra.mrb[0].mxu0 %v969
    %v1497 = vpop.f32.mrb[0].mxu0
    %v1498 = vadd.f32 %v1458, %v1497
    %v1499 = vpop.f32.mrb[0].mxu0
    %v1500 = vpop.f32.mrb[0].mxu0
    %v1501 = vpop.f32.mrb[0].mxu0
    %1502 = vdwg.mxu0
    %1503 = vmatprep.subr.bf16.mxu0 0
    %1504 = vmatpush1.bf16.msra.mxu0 %v1294
    %1505 = vmatprep.subr.bf16.mxu0 0
    %1506 = vmatpush1.bf16.msra.mxu0 %v1295
    %1507 = vmatprep.subr.bf16.mxu0 0
    %1508 = vmatpush1.bf16.msra.mxu0 %v1296
    %1509 = vmatprep.subr.bf16.mxu0 0
    %1510 = vmatpush1.bf16.msra.mxu0 %v1297
    %1511 = vmatprep.subr.bf16.mxu0 0
    %1512 = vmatpush1.bf16.msra.mxu0 %v1298
    %1513 = vmatprep.subr.bf16.mxu0 0
    %1514 = vmatpush1.bf16.msra.mxu0 %v1299
    %1515 = vmatprep.subr.bf16.mxu0 0
    %1516 = vmatpush1.bf16.msra.mxu0 %v1300
    %1517 = vmatprep.subr.bf16.mxu0 0
    %1518 = vmatpush1.bf16.msra.mxu0 %v1301
    %1519 = vmatprep.subr.bf16.mxu0 0
    %1520 = vmatpush1.bf16.msra.mxu0 %v1302
    %1521 = vmatprep.subr.bf16.mxu0 0
    %1522 = vmatpush1.bf16.msra.mxu0 %v1303
    %1523 = vmatprep.subr.bf16.mxu0 0
    %1524 = vmatpush1.bf16.msra.mxu0 %v1304
    %1525 = vmatprep.subr.bf16.mxu0 0
    %1526 = vmatpush1.bf16.msra.mxu0 %v1305
    %1527 = vmatprep.subr.bf16.mxu0 0
    %1528 = vmatpush1.bf16.msra.mxu0 %v1306
    %1529 = vmatprep.subr.bf16.mxu0 0
    %1530 = vmatpush1.bf16.msra.mxu0 %v1307
    %1531 = vmatprep.subr.bf16.mxu0 0
    %1532 = vmatpush1.bf16.msra.mxu0 %v1308
    %1533 = vmatprep.subr.bf16.mxu0 0
    %1534 = vmatpush1.bf16.msra.mxu0 %v1309
    %1535 = vmatprep.mubr.bf16.mxu0 %v972
    %1536 = vmatmul.mubr.bf16.gmra.mrb[0].mxu0 %v971
    %v1537 = vpop.f32.mrb[0].mxu0
    %v1538 = vadd.f32 %v1498, %v1537
    %v1539 = vpop.f32.mrb[0].mxu0
    %v1540 = vpop.f32.mrb[0].mxu0
    %v1541 = vpop.f32.mrb[0].mxu0
    %1542 = vdwg.mxu0
    %1543 = vmatprep.subr.bf16.mxu0 0
    %1544 = vmatpush1.bf16.msra.mxu0 %v1310
    %1545 = vmatprep.subr.bf16.mxu0 0
    %1546 = vmatpush1.bf16.msra.mxu0 %v1381
    %1547 = vmatprep.subr.bf16.mxu0 0
    %1548 = vmatpush1.bf16.msra.mxu0 0
    %1549 = vmatprep.subr.bf16.mxu0 0
    %1550 = vmatpush1.bf16.msra.mxu0 0
    %1551 = vmatprep.subr.bf16.mxu0 0
    %1552 = vmatpush1.bf16.msra.mxu0 0
    %1553 = vmatprep.subr.bf16.mxu0 0
    %1554 = vmatpush1.bf16.msra.mxu0 0
    %1555 = vmatprep.subr.bf16.mxu0 0
    %1556 = vmatpush1.bf16.msra.mxu0 0
    %1557 = vmatprep.subr.bf16.mxu0 0
    %1558 = vmatpush1.bf16.msra.mxu0 0
    %1559 = vmatprep.subr.bf16.mxu0 0
    %1560 = vmatpush1.bf16.msra.mxu0 0
    %1561 = vmatprep.subr.bf16.mxu0 0
    %1562 = vmatpush1.bf16.msra.mxu0 0
    %1563 = vmatprep.subr.bf16.mxu0 0
    %1564 = vmatpush1.bf16.msra.mxu0 0
    %1565 = vmatprep.subr.bf16.mxu0 0
    %1566 = vmatpush1.bf16.msra.mxu0 0
    %1567 = vmatprep.subr.bf16.mxu0 0
    %1568 = vmatpush1.bf16.msra.mxu0 0
    %1569 = vmatprep.subr.bf16.mxu0 0
    %1570 = vmatpush1.bf16.msra.mxu0 0
    %1571 = vmatprep.subr.bf16.mxu0 0
    %1572 = vmatpush1.bf16.msra.mxu0 0
    %1573 = vmatprep.subr.bf16.mxu0 0
    %1574 = vmatpush1.bf16.msra.mxu0 0
    %1575 = vmatprep.mubr.bf16.mxu0 0
    %1576 = vmatmul.mubr.bf16.gmra.mrb[0].mxu0 %v1378
    %v1577 = vpop.f32.mrb[0].mxu0
    %v1578 = vadd.f32 %v1538, %v1577
    %v1579 = vpop.f32.mrb[0].mxu0
    %v1580 = vpop.f32.mrb[0].mxu0
    %v1581 = vpop.f32.mrb[0].mxu0
    %1582 = vdwg.mxu0
    %v1583 = vld [vmem:[%s4] sm:$0x1]
    %v1585 = vlaneseq
    %v1586 = vshrl.u32 %v1585, 7
    %v1587 = vsub.s32 0, %v1586
    %v1588 = vrot.slane %v1583, %v1587
    %v1590 = vadd.f32 %v1578, %v1588
    %v1591 = vsub.f32 0.0, %v1590
    %v1592 = vmul.f32 %v1591, 1.442695
    %v1593 = vpow.pop %v1592
    %v1594 = vadd.f32 %v1593, 1.0
    %v1595 = vrcp.pop %v1594
    %v1596 = vld [vmem:[%s5] sm:$0xff]
    %v1597 = vld [vmem:[%s5 + $0x8] sm:$0xff]
    %v1598 = vld [vmem:[%s5 + $0x10] sm:$0xff]
    %v1599 = vld [vmem:[%s5 + $0x18] sm:$0xff]
    %v1600 = vld [vmem:[%s6] sm:$0x1]
    %v1602 = vlaneseq
    %v1603 = vshrl.u32 %v1602, 7
    %v1604 = vsub.s32 0, %v1603
    %v1605 = vrot.slane %v1600, %v1604
    %vm1607 = vcmask 261120
    %v1609 = vsel %vm1607, %v1595, 0
    %1611 = vmatprep.subr.mxu0 0.0
    %1612 = vmatpush1.msra.mxu0 %v1596
    %1613 = vmatprep.subr.mxu0 0.0
    %1614 = vmatpush1.msra.mxu0 %v1597
    %1615 = vmatprep.subr.mxu0 0.0
    %1616 = vmatpush1.msra.mxu0 %v1598
    %1617 = vmatprep.subr.mxu0 0.0
    %1618 = vmatpush1.msra.mxu0 %v1599
    %1619 = vmatprep.subr.mxu0 0.0
    %1620 = vmatpush1.msra.mxu0 0.0
    %1621 = vmatprep.subr.mxu0 0.0
    %1622 = vmatpush1.msra.mxu0 0.0
    %1623 = vmatprep.subr.mxu0 0.0
    %1624 = vmatpush1.msra.mxu0 0.0
    %1625 = vmatprep.subr.mxu0 0.0
    %1626 = vmatpush1.msra.mxu0 0.0
    %1627 = vmatprep.subr.mxu0 0.0
    %1628 = vmatpush1.msra.mxu0 0.0
    %1629 = vmatprep.subr.mxu0 0.0
    %1630 = vmatpush1.msra.mxu0 0.0
    %1631 = vmatprep.subr.mxu0 0.0
    %1632 = vmatpush1.msra.mxu0 0.0
    %1633 = vmatprep.subr.mxu0 0.0
    %1634 = vmatpush1.msra.mxu0 0.0
    %1635 = vmatprep.subr.mxu0 0.0
    %1636 = vmatpush1.msra.mxu0 0.0
    %1637 = vmatprep.subr.mxu0 0.0
    %1638 = vmatpush1.msra.mxu0 0.0
    %1639 = vmatprep.subr.mxu0 0.0
    %1640 = vmatpush1.msra.mxu0 0.0
    %1641 = vmatprep.subr.mxu0 0.0
    %1642 = vmatpush1.msra.mxu0 0.0
    %1643 = vmatprep.subr.mxu0 0.0
    %1644 = vmatpush1.msra.mxu0 0.0
    %1645 = vmatprep.subr.mxu0 0.0
    %1646 = vmatpush1.msra.mxu0 0.0
    %1647 = vmatprep.subr.mxu0 0.0
    %1648 = vmatpush1.msra.mxu0 0.0
    %1649 = vmatprep.subr.mxu0 0.0
    %1650 = vmatpush1.msra.mxu0 0.0
    %1651 = vmatprep.subr.mxu0 0.0
    %1652 = vmatpush1.msra.mxu0 0.0
    %1653 = vmatprep.subr.mxu0 0.0
    %1654 = vmatpush1.msra.mxu0 0.0
    %1655 = vmatprep.subr.mxu0 0.0
    %1656 = vmatpush1.msra.mxu0 0.0
    %1657 = vmatprep.subr.mxu0 0.0
    %1658 = vmatpush1.msra.mxu0 0.0
    %1659 = vmatprep.subr.mxu0 0.0
    %1660 = vmatpush1.msra.mxu0 0.0
    %1661 = vmatprep.subr.mxu0 0.0
    %1662 = vmatpush1.msra.mxu0 0.0
    %1663 = vmatprep.subr.mxu0 0.0
    %1664 = vmatpush1.msra.mxu0 0.0
    %1665 = vmatprep.subr.mxu0 0.0
    %1666 = vmatpush1.msra.mxu0 0.0
    %1667 = vmatprep.subr.mxu0 0.0
    %1668 = vmatpush1.msra.mxu0 0.0
    %1669 = vmatprep.subr.mxu0 0.0
    %1670 = vmatpush1.msra.mxu0 0.0
    %1671 = vmatprep.subr.mxu0 0.0
    %1672 = vmatpush1.msra.mxu0 0.0
    %1673 = vmatprep.subr.mxu0 0.0
    %1674 = vmatpush1.msra.mxu0 0.0
    %1675 = vmatprep.mubr.f32.mxu0 0.0
    %1676 = vmatmul.mubr.f32.gmra.mrb[0].mxu0 %v1609
    %v1677 = vpop.f32.mrb[0].mxu0
    %v1678 = vadd.f32 %v1605, %v1677
    %v1679 = vpop.f32.mrb[0].mxu0
    %1680 = vdwg.mxu0
    %vm1681 = vcmask 39936
    %v1682 = vsel %vm1681, %v1678, -inf
    %1683 = vmax.xlane.f32.xlu0 %v1682
    %v1684 = vpop.xlane.xlu0 %1683
    %v1685 = vsub.f32 %v1678, %v1684
    %v1686 = vmul.f32 %v1685, 1.442695
    %v1687 = vpow.pop %v1686
    %v1688 = vsel %vm1681, %v1687, 0.0
    %1689 = vadd.xlane.f32.xlu0 %v1688
    %v1690 = vpop.xlane.xlu0 %1689
    %v1691 = vlog2.pop %v1690
    %v1692 = vmul.f32 %v1691, 0.6931472
    %v1693 = vsub.f32 %v1685, %v1692
    %1694 = vst.msk [vmem:[#allocation2] sm:$0xff] %vm1681, %v1693
    // Predicated region
    $region30: #{tpu_custom_call.1} parent=1 // pred_check
      _
    $region31: #{tpu_custom_call.1} parent=1 // pred_check_branch
      %1696 = sbr.rel (0) target = $region33
    $region32: #{tpu_custom_call.1} parent=1 // pred_region
      %s1698 = ssub.s32 128, 128
      %1699 = vsyncadd [#allocation3], %s1698
      %s1701 = sshll.u32 [#allocation2], 4
      %s1702 = int_to_ptr.vmem [resolvable:$true] %s1701
      %1704 = dma.vmem_to_hbm [thread:$0]  %s1702, 128, %s7, [#allocation3]
    $region33: #{tpu_custom_call.1} parent=1 // pred_fallthru
      _
    // Predicated region
    $region34: #{tpu_custom_call.1} parent=1 // pred_check
      _
    $region35: #{tpu_custom_call.1} parent=1 // pred_check_branch
      %1706 = sbr.rel (0) target = $region37
    $region36: #{tpu_custom_call.1} parent=1 // pred_region
      %1707 = dma.done [#allocation3], 128
    $region37: #{tpu_custom_call.1} parent=1 // pred_fallthru
      _
    %1708 = vsyncpa [#allocation3], 1

</llo_original>
